<compile_context>
chip_gen: v6e
topology: v6e:2x2x1
jax: 0.10.0
libtpu: 0.0.40
codegen_flags: <defaults>
</compile_context>

<pallas_src>
import jax
import jax.numpy as jnp
from jax.experimental import pallas as pl
from jax.experimental.pallas import tpu as pltpu


# ------------------------- Fused RNN + heads kernel -------------------------
def _make_fused_kernel(BP, T, H):
    """Fused 2-layer tanh-RNN + merged linear heads (BP, T, H static)."""

    def kernel(x_ref, wih1_ref, b1_ref, whh1_ref, w2_ref, b2_ref,
               wh_ref, bh_ref,
               yz_ref, h1n_ref, h2n_ref,
               h1_slab, h2_slab):
        # Hoisted input projection: one MXU matmul over all timesteps.
        #   pre1[t*BP + b] = x[t, b] @ W_ih1^T + (b_ih1 + b_hh1)
        pre1 = (jnp.dot(x_ref[...], wih1_ref[...],
                        preferred_element_type=jnp.float32)
                + b1_ref[...])                                # (T*BP, H)

        whh1 = whh1_ref[...]                                  # (H, H)
        w2 = w2_ref[...]                                      # (2H, H) = [Wih2^T; Whh2^T]
        b2 = b2_ref[...]                                      # (1, H)

        h1 = jnp.zeros((BP, H), jnp.float32)                  # zero initial states
        h2 = jnp.zeros((BP, H), jnp.float32)

        # Unrolled sequential recurrence (T small & static). Time-major layout
        # makes each per-step read a contiguous sublane tile.
        for t in range(T):
            step = pre1[t * BP:(t + 1) * BP, :]               # (BP, H), contiguous
            h1 = jnp.tanh(step + jnp.dot(h1, whh1,
                                         preferred_element_type=jnp.float32))
            # Fused layer-2 update: one (BP,2H)@(2H,H) matmul instead of two.
            h12 = jnp.concatenate([h1, h2], axis=-1)          # (BP, 2H)
            h2 = jnp.tanh(jnp.dot(h12, w2,
                                  preferred_element_type=jnp.float32) + b2)
            # Slab writes bound live ranges (no T hidden states held in vregs).
            h1_slab[pl.ds(t * BP, BP), :] = h1
            h2_slab[pl.ds(t * BP, BP), :] = h2

        # Merged heads: block-diagonal weight so one lane-dense matmul + one
        # unmasked store covers both linear1(h1) and linear2(h2).
        h_all = jnp.concatenate([h1_slab[...], h2_slab[...]], axis=-1)  # (T*BP, 2H)
        yz_ref[...] = (jnp.dot(h_all, wh_ref[...],
                               preferred_element_type=jnp.float32)
                       + bh_ref[...]).astype(yz_ref.dtype)
        h1n_ref[...] = h1.astype(h1n_ref.dtype)
        h2n_ref[...] = h2.astype(h2n_ref.dtype)

    return kernel


def fused_rnn_forward(x_btd, p):
    """x_btd: (B, T, D) float32 embedded contexts.

    Returns (y_logits (B,T,NY), state1 (1,B,H), z_logits (B,T,NZ), state2 (1,B,H))
    with PyTorch nn.RNN / nn.Linear semantics (zero initial state, eval mode).
    """
    B, T, D = x_btd.shape
    H = p["w_hh1"].shape[0]
    NY = p["w_l1"].shape[0]
    NZ = p["w_l2"].shape[0]

    BP = ((B + 7) // 8) * 8            # pad batch to one full sublane tile
    DP = ((D + 127) // 128) * 128      # pad contraction dim 900 -> 1024
    NOUT = NY + NZ
    NOUT_PAD = max(128, ((NOUT + 127) // 128) * 128)   # lane-dense output

    # Layout / parameter prep done once per forward in XLA (outside kernel):
    x_tbd = jnp.transpose(x_btd, (1, 0, 2))                      # time-major (T,B,D)
    x_tbd = jnp.pad(x_tbd, ((0, 0), (0, BP - B), (0, DP - D)))   # zero-pad B, D
    x2 = x_tbd.reshape(T * BP, DP)

    wih1_t = jnp.pad(jnp.transpose(p["w_ih1"]), ((0, DP - D), (0, 0)))   # (DP, H)
    b1 = (p["b_ih1"] + p["b_hh1"]).reshape(1, H)                         # pre-added biases
    whh1_t = jnp.transpose(p["w_hh1"])                                   # (H, H)
    w2 = jnp.concatenate([jnp.transpose(p["w_ih2"]),
                          jnp.transpose(p["w_hh2"])], axis=0)            # (2H, H)
    b2 = (p["b_ih2"] + p["b_hh2"]).reshape(1, H)

    # Block-diagonal merged head weight (2H, NOUT_PAD), zero-padded lanes.
    wl1_t = jnp.transpose(p["w_l1"])                                     # (H, NY)
    wl2_t = jnp.transpose(p["w_l2"])                                     # (H, NZ)
    wh = jnp.zeros((2 * H, NOUT_PAD), jnp.float32)
    wh = wh.at[:H, :NY].set(wl1_t)
    wh = wh.at[H:, NY:NOUT].set(wl2_t)
    bh = jnp.zeros((1, NOUT_PAD), jnp.float32)
    bh = bh.at[0, :NY].set(p["b_l1"])
    bh = bh.at[0, NY:NOUT].set(p["b_l2"])

    # Single grid-free pallas_call; whole working set (< 1 MiB) lives in VMEM.
    # TODO(synk): at scale, add a batch grid with dimension_semantics=("parallel",)
    # (v7x 2-TC sharding) and row-tile x to respect v7x's 64 MiB VMEM.
    yz, h1n, h2n = pl.pallas_call(
        _make_fused_kernel(BP, T, H),
        out_shape=(
            jax.ShapeDtypeStruct((T * BP, NOUT_PAD), jnp.float32),
            jax.ShapeDtypeStruct((BP, H), jnp.float32),
            jax.ShapeDtypeStruct((BP, H), jnp.float32),
        ),
        scratch_shapes=[
            pltpu.VMEM((T * BP, H), jnp.float32),   # h1 hidden-state slab
            pltpu.VMEM((T * BP, H), jnp.float32),   # h2 hidden-state slab
        ],
    )(x2, wih1_t, b1, whh1_t, w2, b2, wh, bh)

    yz = yz.reshape(T, BP, NOUT_PAD)
    y = jnp.transpose(yz[:, :B, :NY], (1, 0, 2))          # (B, T, NY)
    z = jnp.transpose(yz[:, :B, NY:NOUT], (1, 0, 2))      # (B, T, NZ)
    return y, h1n[None, :B], z, h2n[None, :B]             # states shaped (1, B, H)


# ------------------------------ Glue (JAX) ---------------------------------
def contextwin_2(idx_bt, win=3, pad_idx=0):
    # TODO(synk): original load.pad_sentences / tools.contextwin_2 are external;
    # reimplemented as a symmetric window of `win` token indices padded with pad_idx.
    half = win // 2
    padded = jnp.pad(idx_bt, ((0, 0), (half, half)), constant_values=pad_idx)
    T = idx_bt.shape[1]
    cols = [padded[:, k:k + T] for k in range(win)]
    return jnp.stack(cols, axis=-1)                    # (B, T, win)


def model_forward(params, cwards_bt):
    """cwards_bt: (B, T) int32 token indices (already padded)."""
    embw = params["embw"]
    B, T = cwards_bt.shape
    ctx = contextwin_2(cwards_bt, 3)                   # (B, T, 3)
    emb = jnp.take(embw, ctx, axis=0)                  # (B, T, 3, E)
    x = emb.reshape(B, T, -1)                          # (B, T, 3E = 900)
    # TODO(synk): nn.Dropout(0.5) treated as identity (eval-mode semantics).

    y, state1, z, state2 = fused_rnn_forward(x, params)

    y_pred = jnp.argmax(y, -1).reshape(B, -1)
    z_pred = jnp.argmax(z, -1).reshape(B, -1)
    return (y, state1, z, state2), (y_pred, z_pred)


# ------------------------------- Main ---------------------------------------
if __name__ == "__main__":
    V, E = 50, 300          # vocab, embedding dim  (3 * 300 = 900 = RNN input)
    H, NY, NZ = 32, 5, 7    # num_hiddens, ny, nz
    B, T = 2, 8             # small batch / sequence
    D = 3 * E

    key = jax.random.PRNGKey(0)
    ks = jax.random.split(key, 14)
    s = 0.05
    params = {
        "embw":  jax.random.normal(ks[0], (V, E), jnp.float32) * s,
        "w_ih1": jax.random.normal(ks[1], (H, D), jnp.float32) * s,
        "w_hh1": jax.random.normal(ks[2], (H, H), jnp.float32) * s,
        "b_ih1": jax.random.normal(ks[3], (H,), jnp.float32) * s,
        "b_hh1": jax.random.normal(ks[4], (H,), jnp.float32) * s,
        "w_ih2": jax.random.normal(ks[5], (H, H), jnp.float32) * s,
        "w_hh2": jax.random.normal(ks[6], (H, H), jnp.float32) * s,
        "b_ih2": jax.random.normal(ks[7], (H,), jnp.float32) * s,
        "b_hh2": jax.random.normal(ks[8], (H,), jnp.float32) * s,
        "w_l1":  jax.random.normal(ks[9], (NY, H), jnp.float32) * s,
        "b_l1":  jax.random.normal(ks[10], (NY,), jnp.float32) * s,
        "w_l2":  jax.random.normal(ks[11], (NZ, H), jnp.float32) * s,
        "b_l2":  jax.random.normal(ks[12], (NZ,), jnp.float32) * s,
    }
    cwards = jax.random.randint(ks[13], (B, T), 0, V, dtype=jnp.int32)

    (y, state1, z, state2), (y_pred, z_pred) = jax.jit(model_forward)(params, cwards)
    jax.block_until_ready((y, state1, z, state2, y_pred, z_pred))

    assert y.shape == (B, T, NY) and z.shape == (B, T, NZ)
    assert state1.shape == (1, B, H) and state2.shape == (1, B, H)
    assert y_pred.shape == (B, T) and z_pred.shape == (B, T)
    print("KERNEL_OK")
</pallas_src>

<mosaic_0001>
module attributes {stable_mosaic.version = 11 : i64} {
  func.func @kernel(%arg0: memref<64x1024xf32, #tpu.memory_space<vmem>>, %arg1: memref<1024x32xf32, #tpu.memory_space<vmem>>, %arg2: memref<1x32xf32, #tpu.memory_space<vmem>>, %arg3: memref<32x32xf32, #tpu.memory_space<vmem>>, %arg4: memref<64x32xf32, #tpu.memory_space<vmem>>, %arg5: memref<1x32xf32, #tpu.memory_space<vmem>>, %arg6: memref<64x128xf32, #tpu.memory_space<vmem>>, %arg7: memref<1x128xf32, #tpu.memory_space<vmem>>, %arg8: memref<64x128xf32, #tpu.memory_space<vmem>>, %arg9: memref<8x32xf32, #tpu.memory_space<vmem>>, %arg10: memref<8x32xf32, #tpu.memory_space<vmem>>, %arg11: memref<64x32xf32, #tpu.memory_space<vmem>>, %arg12: memref<64x32xf32, #tpu.memory_space<vmem>>) attributes {dimension_semantics = [], scalar_prefetch = 0 : i64, scratch_operands = 2 : i64, tpu.core_type = #tpu.core_type<tc>} {
    %c0 = arith.constant 0 : index
    %c0_0 = arith.constant 0 : index
    %0 = vector.load %arg0[%c0, %c0_0] : memref<64x1024xf32, #tpu.memory_space<vmem>>, vector<64x1024xf32>
    %c0_1 = arith.constant 0 : index
    %c0_2 = arith.constant 0 : index
    %1 = vector.load %arg1[%c0_1, %c0_2] : memref<1024x32xf32, #tpu.memory_space<vmem>>, vector<1024x32xf32>
    %cst = arith.constant dense<0.000000e+00> : vector<64x32xf32>
    %2 = tpu.matmul %0, %1, %cst {dimension_numbers = #tpu.dot_dimension_numbers<[1], [0], [0], [1], [0, 0, 1, 1], [], []>} : vector<64x1024xf32>, vector<1024x32xf32>, vector<64x32xf32> -> vector<64x32xf32>
    %c0_3 = arith.constant 0 : index
    %c0_4 = arith.constant 0 : index
    %3 = vector.load %arg2[%c0_3, %c0_4] : memref<1x32xf32, #tpu.memory_space<vmem>>, vector<1x32xf32>
    %4 = vector.broadcast %3 : vector<1x32xf32> to vector<64x32xf32>
    %5 = arith.addf %2, %4 : vector<64x32xf32>
    %c0_5 = arith.constant 0 : index
    %c0_6 = arith.constant 0 : index
    %6 = vector.load %arg3[%c0_5, %c0_6] : memref<32x32xf32, #tpu.memory_space<vmem>>, vector<32x32xf32>
    %c0_7 = arith.constant 0 : index
    %c0_8 = arith.constant 0 : index
    %7 = vector.load %arg4[%c0_7, %c0_8] : memref<64x32xf32, #tpu.memory_space<vmem>>, vector<64x32xf32>
    %c0_9 = arith.constant 0 : index
    %c0_10 = arith.constant 0 : index
    %8 = vector.load %arg5[%c0_9, %c0_10] : memref<1x32xf32, #tpu.memory_space<vmem>>, vector<1x32xf32>
    %cst_11 = arith.constant 0.000000e+00 : f32
    %9 = vector.broadcast %cst_11 : f32 to vector<8x32xf32>
    %cst_12 = arith.constant 0.000000e+00 : f32
    %10 = vector.broadcast %cst_12 : f32 to vector<8x32xf32>
    %11 = vector.extract_strided_slice %5 {offsets = [0, 0], sizes = [8, 32], strides = [1, 1]} : vector<64x32xf32> to vector<8x32xf32>
    %cst_13 = arith.constant dense<0.000000e+00> : vector<8x32xf32>
    %12 = tpu.matmul %9, %6, %cst_13 {dimension_numbers = #tpu.dot_dimension_numbers<[1], [0], [0], [1], [0, 0, 1, 1], [], []>} : vector<8x32xf32>, vector<32x32xf32>, vector<8x32xf32> -> vector<8x32xf32>
    %13 = arith.addf %11, %12 : vector<8x32xf32>
    %14 = math.tanh %13 : vector<8x32xf32>
    %15 = tpu.concatenate %14, %10 in 1 : vector<8x32xf32>, vector<8x32xf32> -> vector<8x64xf32>
    %cst_14 = arith.constant dense<0.000000e+00> : vector<8x32xf32>
    %16 = tpu.matmul %15, %7, %cst_14 {dimension_numbers = #tpu.dot_dimension_numbers<[1], [0], [0], [1], [0, 0, 1, 1], [], []>} : vector<8x64xf32>, vector<64x32xf32>, vector<8x32xf32> -> vector<8x32xf32>
    %17 = vector.broadcast %8 : vector<1x32xf32> to vector<8x32xf32>
    %18 = arith.addf %16, %17 : vector<8x32xf32>
    %19 = math.tanh %18 : vector<8x32xf32>
    %c0_15 = arith.constant 0 : index
    %c0_16 = arith.constant 0 : index
    %20 = vector.load %arg11[%c0_15, %c0_16] : memref<64x32xf32, #tpu.memory_space<vmem>>, vector<8x32xf32>
    tpu.vector_store %arg11[%c0_15, %c0_16], %14 {strides = array<i32>} : memref<64x32xf32, #tpu.memory_space<vmem>>, vector<8x32xf32>,
    %c0_17 = arith.constant 0 : index
    %c0_18 = arith.constant 0 : index
    %21 = vector.load %arg12[%c0_17, %c0_18] : memref<64x32xf32, #tpu.memory_space<vmem>>, vector<8x32xf32>
    tpu.vector_store %arg12[%c0_17, %c0_18], %19 {strides = array<i32>} : memref<64x32xf32, #tpu.memory_space<vmem>>, vector<8x32xf32>,
    %22 = vector.extract_strided_slice %5 {offsets = [8, 0], sizes = [8, 32], strides = [1, 1]} : vector<64x32xf32> to vector<8x32xf32>
    %cst_19 = arith.constant dense<0.000000e+00> : vector<8x32xf32>
    %23 = tpu.matmul %14, %6, %cst_19 {dimension_numbers = #tpu.dot_dimension_numbers<[1], [0], [0], [1], [0, 0, 1, 1], [], []>} : vector<8x32xf32>, vector<32x32xf32>, vector<8x32xf32> -> vector<8x32xf32>
    %24 = arith.addf %22, %23 : vector<8x32xf32>
    %25 = math.tanh %24 : vector<8x32xf32>
    %26 = tpu.concatenate %25, %19 in 1 : vector<8x32xf32>, vector<8x32xf32> -> vector<8x64xf32>
    %cst_20 = arith.constant dense<0.000000e+00> : vector<8x32xf32>
    %27 = tpu.matmul %26, %7, %cst_20 {dimension_numbers = #tpu.dot_dimension_numbers<[1], [0], [0], [1], [0, 0, 1, 1], [], []>} : vector<8x64xf32>, vector<64x32xf32>, vector<8x32xf32> -> vector<8x32xf32>
    %28 = vector.broadcast %8 : vector<1x32xf32> to vector<8x32xf32>
    %29 = arith.addf %27, %28 : vector<8x32xf32>
    %30 = math.tanh %29 : vector<8x32xf32>
    %c8 = arith.constant 8 : index
    %c0_21 = arith.constant 0 : index
    %31 = vector.load %arg11[%c8, %c0_21] : memref<64x32xf32, #tpu.memory_space<vmem>>, vector<8x32xf32>
    tpu.vector_store %arg11[%c8, %c0_21], %25 {strides = array<i32>} : memref<64x32xf32, #tpu.memory_space<vmem>>, vector<8x32xf32>,
    %c8_22 = arith.constant 8 : index
    %c0_23 = arith.constant 0 : index
    %32 = vector.load %arg12[%c8_22, %c0_23] : memref<64x32xf32, #tpu.memory_space<vmem>>, vector<8x32xf32>
    tpu.vector_store %arg12[%c8_22, %c0_23], %30 {strides = array<i32>} : memref<64x32xf32, #tpu.memory_space<vmem>>, vector<8x32xf32>,
    %33 = vector.extract_strided_slice %5 {offsets = [16, 0], sizes = [8, 32], strides = [1, 1]} : vector<64x32xf32> to vector<8x32xf32>
    %cst_24 = arith.constant dense<0.000000e+00> : vector<8x32xf32>
    %34 = tpu.matmul %25, %6, %cst_24 {dimension_numbers = #tpu.dot_dimension_numbers<[1], [0], [0], [1], [0, 0, 1, 1], [], []>} : vector<8x32xf32>, vector<32x32xf32>, vector<8x32xf32> -> vector<8x32xf32>
    %35 = arith.addf %33, %34 : vector<8x32xf32>
    %36 = math.tanh %35 : vector<8x32xf32>
    %37 = tpu.concatenate %36, %30 in 1 : vector<8x32xf32>, vector<8x32xf32> -> vector<8x64xf32>
    %cst_25 = arith.constant dense<0.000000e+00> : vector<8x32xf32>
    %38 = tpu.matmul %37, %7, %cst_25 {dimension_numbers = #tpu.dot_dimension_numbers<[1], [0], [0], [1], [0, 0, 1, 1], [], []>} : vector<8x64xf32>, vector<64x32xf32>, vector<8x32xf32> -> vector<8x32xf32>
    %39 = vector.broadcast %8 : vector<1x32xf32> to vector<8x32xf32>
    %40 = arith.addf %38, %39 : vector<8x32xf32>
    %41 = math.tanh %40 : vector<8x32xf32>
    %c16 = arith.constant 16 : index
    %c0_26 = arith.constant 0 : index
    %42 = vector.load %arg11[%c16, %c0_26] : memref<64x32xf32, #tpu.memory_space<vmem>>, vector<8x32xf32>
    tpu.vector_store %arg11[%c16, %c0_26], %36 {strides = array<i32>} : memref<64x32xf32, #tpu.memory_space<vmem>>, vector<8x32xf32>,
    %c16_27 = arith.constant 16 : index
    %c0_28 = arith.constant 0 : index
    %43 = vector.load %arg12[%c16_27, %c0_28] : memref<64x32xf32, #tpu.memory_space<vmem>>, vector<8x32xf32>
    tpu.vector_store %arg12[%c16_27, %c0_28], %41 {strides = array<i32>} : memref<64x32xf32, #tpu.memory_space<vmem>>, vector<8x32xf32>,
    %44 = vector.extract_strided_slice %5 {offsets = [24, 0], sizes = [8, 32], strides = [1, 1]} : vector<64x32xf32> to vector<8x32xf32>
    %cst_29 = arith.constant dense<0.000000e+00> : vector<8x32xf32>
    %45 = tpu.matmul %36, %6, %cst_29 {dimension_numbers = #tpu.dot_dimension_numbers<[1], [0], [0], [1], [0, 0, 1, 1], [], []>} : vector<8x32xf32>, vector<32x32xf32>, vector<8x32xf32> -> vector<8x32xf32>
    %46 = arith.addf %44, %45 : vector<8x32xf32>
    %47 = math.tanh %46 : vector<8x32xf32>
    %48 = tpu.concatenate %47, %41 in 1 : vector<8x32xf32>, vector<8x32xf32> -> vector<8x64xf32>
    %cst_30 = arith.constant dense<0.000000e+00> : vector<8x32xf32>
    %49 = tpu.matmul %48, %7, %cst_30 {dimension_numbers = #tpu.dot_dimension_numbers<[1], [0], [0], [1], [0, 0, 1, 1], [], []>} : vector<8x64xf32>, vector<64x32xf32>, vector<8x32xf32> -> vector<8x32xf32>
    %50 = vector.broadcast %8 : vector<1x32xf32> to vector<8x32xf32>
    %51 = arith.addf %49, %50 : vector<8x32xf32>
    %52 = math.tanh %51 : vector<8x32xf32>
    %c24 = arith.constant 24 : index
    %c0_31 = arith.constant 0 : index
    %53 = vector.load %arg11[%c24, %c0_31] : memref<64x32xf32, #tpu.memory_space<vmem>>, vector<8x32xf32>
    tpu.vector_store %arg11[%c24, %c0_31], %47 {strides = array<i32>} : memref<64x32xf32, #tpu.memory_space<vmem>>, vector<8x32xf32>,
    %c24_32 = arith.constant 24 : index
    %c0_33 = arith.constant 0 : index
    %54 = vector.load %arg12[%c24_32, %c0_33] : memref<64x32xf32, #tpu.memory_space<vmem>>, vector<8x32xf32>
    tpu.vector_store %arg12[%c24_32, %c0_33], %52 {strides = array<i32>} : memref<64x32xf32, #tpu.memory_space<vmem>>, vector<8x32xf32>,
    %55 = vector.extract_strided_slice %5 {offsets = [32, 0], sizes = [8, 32], strides = [1, 1]} : vector<64x32xf32> to vector<8x32xf32>
    %cst_34 = arith.constant dense<0.000000e+00> : vector<8x32xf32>
    %56 = tpu.matmul %47, %6, %cst_34 {dimension_numbers = #tpu.dot_dimension_numbers<[1], [0], [0], [1], [0, 0, 1, 1], [], []>} : vector<8x32xf32>, vector<32x32xf32>, vector<8x32xf32> -> vector<8x32xf32>
    %57 = arith.addf %55, %56 : vector<8x32xf32>
    %58 = math.tanh %57 : vector<8x32xf32>
    %59 = tpu.concatenate %58, %52 in 1 : vector<8x32xf32>, vector<8x32xf32> -> vector<8x64xf32>
    %cst_35 = arith.constant dense<0.000000e+00> : vector<8x32xf32>
    %60 = tpu.matmul %59, %7, %cst_35 {dimension_numbers = #tpu.dot_dimension_numbers<[1], [0], [0], [1], [0, 0, 1, 1], [], []>} : vector<8x64xf32>, vector<64x32xf32>, vector<8x32xf32> -> vector<8x32xf32>
    %61 = vector.broadcast %8 : vector<1x32xf32> to vector<8x32xf32>
    %62 = arith.addf %60, %61 : vector<8x32xf32>
    %63 = math.tanh %62 : vector<8x32xf32>
    %c32 = arith.constant 32 : index
    %c0_36 = arith.constant 0 : index
    %64 = vector.load %arg11[%c32, %c0_36] : memref<64x32xf32, #tpu.memory_space<vmem>>, vector<8x32xf32>
    tpu.vector_store %arg11[%c32, %c0_36], %58 {strides = array<i32>} : memref<64x32xf32, #tpu.memory_space<vmem>>, vector<8x32xf32>,
    %c32_37 = arith.constant 32 : index
    %c0_38 = arith.constant 0 : index
    %65 = vector.load %arg12[%c32_37, %c0_38] : memref<64x32xf32, #tpu.memory_space<vmem>>, vector<8x32xf32>
    tpu.vector_store %arg12[%c32_37, %c0_38], %63 {strides = array<i32>} : memref<64x32xf32, #tpu.memory_space<vmem>>, vector<8x32xf32>,
    %66 = vector.extract_strided_slice %5 {offsets = [40, 0], sizes = [8, 32], strides = [1, 1]} : vector<64x32xf32> to vector<8x32xf32>
    %cst_39 = arith.constant dense<0.000000e+00> : vector<8x32xf32>
    %67 = tpu.matmul %58, %6, %cst_39 {dimension_numbers = #tpu.dot_dimension_numbers<[1], [0], [0], [1], [0, 0, 1, 1], [], []>} : vector<8x32xf32>, vector<32x32xf32>, vector<8x32xf32> -> vector<8x32xf32>
    %68 = arith.addf %66, %67 : vector<8x32xf32>
    %69 = math.tanh %68 : vector<8x32xf32>
    %70 = tpu.concatenate %69, %63 in 1 : vector<8x32xf32>, vector<8x32xf32> -> vector<8x64xf32>
    %cst_40 = arith.constant dense<0.000000e+00> : vector<8x32xf32>
    %71 = tpu.matmul %70, %7, %cst_40 {dimension_numbers = #tpu.dot_dimension_numbers<[1], [0], [0], [1], [0, 0, 1, 1], [], []>} : vector<8x64xf32>, vector<64x32xf32>, vector<8x32xf32> -> vector<8x32xf32>
    %72 = vector.broadcast %8 : vector<1x32xf32> to vector<8x32xf32>
    %73 = arith.addf %71, %72 : vector<8x32xf32>
    %74 = math.tanh %73 : vector<8x32xf32>
    %c40 = arith.constant 40 : index
    %c0_41 = arith.constant 0 : index
    %75 = vector.load %arg11[%c40, %c0_41] : memref<64x32xf32, #tpu.memory_space<vmem>>, vector<8x32xf32>
    tpu.vector_store %arg11[%c40, %c0_41], %69 {strides = array<i32>} : memref<64x32xf32, #tpu.memory_space<vmem>>, vector<8x32xf32>,
    %c40_42 = arith.constant 40 : index
    %c0_43 = arith.constant 0 : index
    %76 = vector.load %arg12[%c40_42, %c0_43] : memref<64x32xf32, #tpu.memory_space<vmem>>, vector<8x32xf32>
    tpu.vector_store %arg12[%c40_42, %c0_43], %74 {strides = array<i32>} : memref<64x32xf32, #tpu.memory_space<vmem>>, vector<8x32xf32>,
    %77 = vector.extract_strided_slice %5 {offsets = [48, 0], sizes = [8, 32], strides = [1, 1]} : vector<64x32xf32> to vector<8x32xf32>
    %cst_44 = arith.constant dense<0.000000e+00> : vector<8x32xf32>
    %78 = tpu.matmul %69, %6, %cst_44 {dimension_numbers = #tpu.dot_dimension_numbers<[1], [0], [0], [1], [0, 0, 1, 1], [], []>} : vector<8x32xf32>, vector<32x32xf32>, vector<8x32xf32> -> vector<8x32xf32>
    %79 = arith.addf %77, %78 : vector<8x32xf32>
    %80 = math.tanh %79 : vector<8x32xf32>
    %81 = tpu.concatenate %80, %74 in 1 : vector<8x32xf32>, vector<8x32xf32> -> vector<8x64xf32>
    %cst_45 = arith.constant dense<0.000000e+00> : vector<8x32xf32>
    %82 = tpu.matmul %81, %7, %cst_45 {dimension_numbers = #tpu.dot_dimension_numbers<[1], [0], [0], [1], [0, 0, 1, 1], [], []>} : vector<8x64xf32>, vector<64x32xf32>, vector<8x32xf32> -> vector<8x32xf32>
    %83 = vector.broadcast %8 : vector<1x32xf32> to vector<8x32xf32>
    %84 = arith.addf %82, %83 : vector<8x32xf32>
    %85 = math.tanh %84 : vector<8x32xf32>
    %c48 = arith.constant 48 : index
    %c0_46 = arith.constant 0 : index
    %86 = vector.load %arg11[%c48, %c0_46] : memref<64x32xf32, #tpu.memory_space<vmem>>, vector<8x32xf32>
    tpu.vector_store %arg11[%c48, %c0_46], %80 {strides = array<i32>} : memref<64x32xf32, #tpu.memory_space<vmem>>, vector<8x32xf32>,
    %c48_47 = arith.constant 48 : index
    %c0_48 = arith.constant 0 : index
    %87 = vector.load %arg12[%c48_47, %c0_48] : memref<64x32xf32, #tpu.memory_space<vmem>>, vector<8x32xf32>
    tpu.vector_store %arg12[%c48_47, %c0_48], %85 {strides = array<i32>} : memref<64x32xf32, #tpu.memory_space<vmem>>, vector<8x32xf32>,
    %88 = vector.extract_strided_slice %5 {offsets = [56, 0], sizes = [8, 32], strides = [1, 1]} : vector<64x32xf32> to vector<8x32xf32>
    %cst_49 = arith.constant dense<0.000000e+00> : vector<8x32xf32>
    %89 = tpu.matmul %80, %6, %cst_49 {dimension_numbers = #tpu.dot_dimension_numbers<[1], [0], [0], [1], [0, 0, 1, 1], [], []>} : vector<8x32xf32>, vector<32x32xf32>, vector<8x32xf32> -> vector<8x32xf32>
    %90 = arith.addf %88, %89 : vector<8x32xf32>
    %91 = math.tanh %90 : vector<8x32xf32>
    %92 = tpu.concatenate %91, %85 in 1 : vector<8x32xf32>, vector<8x32xf32> -> vector<8x64xf32>
    %cst_50 = arith.constant dense<0.000000e+00> : vector<8x32xf32>
    %93 = tpu.matmul %92, %7, %cst_50 {dimension_numbers = #tpu.dot_dimension_numbers<[1], [0], [0], [1], [0, 0, 1, 1], [], []>} : vector<8x64xf32>, vector<64x32xf32>, vector<8x32xf32> -> vector<8x32xf32>
    %94 = vector.broadcast %8 : vector<1x32xf32> to vector<8x32xf32>
    %95 = arith.addf %93, %94 : vector<8x32xf32>
    %96 = math.tanh %95 : vector<8x32xf32>
    %c56 = arith.constant 56 : index
    %c0_51 = arith.constant 0 : index
    %97 = vector.load %arg11[%c56, %c0_51] : memref<64x32xf32, #tpu.memory_space<vmem>>, vector<8x32xf32>
    tpu.vector_store %arg11[%c56, %c0_51], %91 {strides = array<i32>} : memref<64x32xf32, #tpu.memory_space<vmem>>, vector<8x32xf32>,
    %c56_52 = arith.constant 56 : index
    %c0_53 = arith.constant 0 : index
    %98 = vector.load %arg12[%c56_52, %c0_53] : memref<64x32xf32, #tpu.memory_space<vmem>>, vector<8x32xf32>
    tpu.vector_store %arg12[%c56_52, %c0_53], %96 {strides = array<i32>} : memref<64x32xf32, #tpu.memory_space<vmem>>, vector<8x32xf32>,
    %c0_54 = arith.constant 0 : index
    %c0_55 = arith.constant 0 : index
    %99 = vector.load %arg11[%c0_54, %c0_55] : memref<64x32xf32, #tpu.memory_space<vmem>>, vector<64x32xf32>
    %c0_56 = arith.constant 0 : index
    %c0_57 = arith.constant 0 : index
    %100 = vector.load %arg12[%c0_56, %c0_57] : memref<64x32xf32, #tpu.memory_space<vmem>>, vector<64x32xf32>
    %101 = tpu.concatenate %99, %100 in 1 : vector<64x32xf32>, vector<64x32xf32> -> vector<64x64xf32>
    %c0_58 = arith.constant 0 : index
    %c0_59 = arith.constant 0 : index
    %102 = vector.load %arg6[%c0_58, %c0_59] : memref<64x128xf32, #tpu.memory_space<vmem>>, vector<64x128xf32>
    %cst_60 = arith.constant dense<0.000000e+00> : vector<64x128xf32>
    %103 = tpu.matmul %101, %102, %cst_60 {dimension_numbers = #tpu.dot_dimension_numbers<[1], [0], [0], [1], [0, 0, 1, 1], [], []>} : vector<64x64xf32>, vector<64x128xf32>, vector<64x128xf32> -> vector<64x128xf32>
    %c0_61 = arith.constant 0 : index
    %c0_62 = arith.constant 0 : index
    %104 = vector.load %arg7[%c0_61, %c0_62] : memref<1x128xf32, #tpu.memory_space<vmem>>, vector<1x128xf32>
    %105 = vector.broadcast %104 : vector<1x128xf32> to vector<64x128xf32>
    %106 = arith.addf %103, %105 : vector<64x128xf32>
    %c0_63 = arith.constant 0 : index
    %c0_64 = arith.constant 0 : index
    %107 = vector.load %arg8[%c0_63, %c0_64] : memref<64x128xf32, #tpu.memory_space<vmem>>, vector<64x128xf32>
    tpu.vector_store %arg8[%c0_63, %c0_64], %106 {strides = array<i32>} : memref<64x128xf32, #tpu.memory_space<vmem>>, vector<64x128xf32>,
    %c0_65 = arith.constant 0 : index
    %c0_66 = arith.constant 0 : index
    %108 = vector.load %arg9[%c0_65, %c0_66] : memref<8x32xf32, #tpu.memory_space<vmem>>, vector<8x32xf32>
    tpu.vector_store %arg9[%c0_65, %c0_66], %91 {strides = array<i32>} : memref<8x32xf32, #tpu.memory_space<vmem>>, vector<8x32xf32>,
    %c0_67 = arith.constant 0 : index
    %c0_68 = arith.constant 0 : index
    %109 = vector.load %arg10[%c0_67, %c0_68] : memref<8x32xf32, #tpu.memory_space<vmem>>, vector<8x32xf32>
    tpu.vector_store %arg10[%c0_67, %c0_68], %96 {strides = array<i32>} : memref<8x32xf32, #tpu.memory_space<vmem>>, vector<8x32xf32>,
    return
  }
}

</mosaic_0001>

<llo_original>
// kernel: model_forward.1
$region0: #{model_forward.1}
  #allocation0 [shape = 'u32[]', space=smem, size = 0x4, offset = 0x4, fixed_abs, tag = 'smem constant byte address 0x4 - core index']
  #allocation1 [shape = 'u32[144,128]{1,0:T(1,128)}', space=vmem, size = 0x12000, scoped, tag = 'internal scratch']
  #allocation2 [shape = 'f32[64,32]{1,0:T(8,128)}', space=vmem, size = 0x8000, scoped, tag = 'scratch operand']
  #allocation3 [shape = 'f32[64,32]{1,0:T(8,128)}', space=vmem, size = 0x8000, scoped, tag = 'scratch operand']
  %s0 = inlined_call_operand.vmem [shape: f32[64,1024], index: 0, kind: input, shape index: {}]
  %s1 = inlined_call_operand.vmem [shape: f32[1024,32], index: 1, kind: input, shape index: {}]
  %s2 = inlined_call_operand.vmem [shape: f32[1,32], index: 2, kind: input, shape index: {}]
  %s3 = inlined_call_operand.vmem [shape: f32[32,32], index: 3, kind: input, shape index: {}]
  %s4 = inlined_call_operand.vmem [shape: f32[64,32], index: 4, kind: input, shape index: {}]
  %s5 = inlined_call_operand.vmem [shape: f32[1,32], index: 5, kind: input, shape index: {}]
  %s6 = inlined_call_operand.vmem [shape: f32[64,128], index: 6, kind: input, shape index: {}]
  %s7 = inlined_call_operand.vmem [shape: f32[1,128], index: 7, kind: input, shape index: {}]
  %s8 = inlined_call_operand.vmem [shape: f32[64,128], index: 8, kind: output, shape index: {0}]
  %s9 = inlined_call_operand.vmem [shape: f32[8,32], index: 9, kind: output, shape index: {1}]
  %s10 = inlined_call_operand.vmem [shape: f32[8,32], index: 10, kind: output, shape index: {2}]
  %11 = xla_tuple %s8, %s9, %s10
  %s12 = sld [smem:[#allocation0]]
  $region58: #{model_forward.1} parent=0
    _
  %s14 = ssub.s32 1, %s12
  %s15 = scalar_select 0, %s14, %s12
  // Predicated region
  $region2: #{model_forward.1} parent=0 // pred_check
    _
  $region3: #{model_forward.1} parent=0 // pred_check_branch
    %17 = sbr.rel (0) target = $region5
  $region4: #{model_forward.1} parent=0 // pred_region
    _
  $region5: #{model_forward.1} parent=0 // pred_fallthru
    _
  // Predicated region
  $region6: #{model_forward.1} parent=0 // pred_check
    _
  $region7: #{model_forward.1} parent=0 // pred_check_branch
    %19 = sbr.rel (0) target = $region9
  $region8: #{model_forward.1} parent=0 // pred_region
    _
  $region9: #{model_forward.1} parent=0 // pred_fallthru
    _
  // Predicated region
  $region10: #{model_forward.1} parent=0 // pred_check
    _
  $region11: #{model_forward.1} parent=0 // pred_check_branch
    %21 = sbr.rel (0) target = $region13
  $region12: #{model_forward.1} parent=0 // pred_region
    _
  $region13: #{model_forward.1} parent=0 // pred_fallthru
    _
  // Predicated region
  $region14: #{model_forward.1} parent=0 // pred_check
    _
  $region15: #{model_forward.1} parent=0 // pred_check_branch
    %23 = sbr.rel (0) target = $region17
  $region16: #{model_forward.1} parent=0 // pred_region
    _
  $region17: #{model_forward.1} parent=0 // pred_fallthru
    _
  // Predicated region
  $region18: #{model_forward.1} parent=0 // pred_check
    _
  $region19: #{model_forward.1} parent=0 // pred_check_branch
    %25 = sbr.rel (0) target = $region21
  $region20: #{model_forward.1} parent=0 // pred_region
    _
  $region21: #{model_forward.1} parent=0 // pred_fallthru
    _
  // Predicated region
  $region22: #{model_forward.1} parent=0 // pred_check
    _
  $region23: #{model_forward.1} parent=0 // pred_check_branch
    %27 = sbr.rel (0) target = $region25
  $region24: #{model_forward.1} parent=0 // pred_region
    _
  $region25: #{model_forward.1} parent=0 // pred_fallthru
    _
  // Predicated region
  $region26: #{model_forward.1} parent=0 // pred_check
    _
  $region27: #{model_forward.1} parent=0 // pred_check_branch
    %29 = sbr.rel (0) target = $region29
  $region28: #{model_forward.1} parent=0 // pred_region
    _
  $region29: #{model_forward.1} parent=0 // pred_fallthru
    _
  // Predicated region
  $region30: #{model_forward.1} parent=0 // pred_check
    _
  $region31: #{model_forward.1} parent=0 // pred_check_branch
    %31 = sbr.rel (0) target = $region33
  $region32: #{model_forward.1} parent=0 // pred_region
    _
  $region33: #{model_forward.1} parent=0 // pred_fallthru
    _
  %v32 = vld [vmem:[%s0] sm:$0xff]
  %v33 = vld [vmem:[%s0 + $0x8] sm:$0xff]
  %v34 = vld [vmem:[%s0 + $0x10] sm:$0xff]
  %v35 = vld [vmem:[%s0 + $0x18] sm:$0xff]
  %v36 = vld [vmem:[%s0 + $0x20] sm:$0xff]
  %v37 = vld [vmem:[%s0 + $0x28] sm:$0xff]
  %v38 = vld [vmem:[%s0 + $0x30] sm:$0xff]
  %v39 = vld [vmem:[%s0 + $0x38] sm:$0xff]
  %v40 = vld [vmem:[%s0 + $0x40] sm:$0xff]
  %v41 = vld [vmem:[%s0 + $0x48] sm:$0xff]
  %v42 = vld [vmem:[%s0 + $0x50] sm:$0xff]
  %v43 = vld [vmem:[%s0 + $0x58] sm:$0xff]
  %v44 = vld [vmem:[%s0 + $0x60] sm:$0xff]
  %v45 = vld [vmem:[%s0 + $0x68] sm:$0xff]
  %v46 = vld [vmem:[%s0 + $0x70] sm:$0xff]
  %v47 = vld [vmem:[%s0 + $0x78] sm:$0xff]
  %v48 = vld [vmem:[%s0 + $0x80] sm:$0xff]
  %v49 = vld [vmem:[%s0 + $0x88] sm:$0xff]
  %v50 = vld [vmem:[%s0 + $0x90] sm:$0xff]
  %v51 = vld [vmem:[%s0 + $0x98] sm:$0xff]
  %v52 = vld [vmem:[%s0 + $0xa0] sm:$0xff]
  %v53 = vld [vmem:[%s0 + $0xa8] sm:$0xff]
  %v54 = vld [vmem:[%s0 + $0xb0] sm:$0xff]
  %v55 = vld [vmem:[%s0 + $0xb8] sm:$0xff]
  %v56 = vld [vmem:[%s0 + $0xc0] sm:$0xff]
  %v57 = vld [vmem:[%s0 + $0xc8] sm:$0xff]
  %v58 = vld [vmem:[%s0 + $0xd0] sm:$0xff]
  %v59 = vld [vmem:[%s0 + $0xd8] sm:$0xff]
  %v60 = vld [vmem:[%s0 + $0xe0] sm:$0xff]
  %v61 = vld [vmem:[%s0 + $0xe8] sm:$0xff]
  %v62 = vld [vmem:[%s0 + $0xf0] sm:$0xff]
  %v63 = vld [vmem:[%s0 + $0xf8] sm:$0xff]
  %v64 = vld [vmem:[%s0 + $0x100] sm:$0xff]
  %v65 = vld [vmem:[%s0 + $0x108] sm:$0xff]
  %v66 = vld [vmem:[%s0 + $0x110] sm:$0xff]
  %v67 = vld [vmem:[%s0 + $0x118] sm:$0xff]
  %v68 = vld [vmem:[%s0 + $0x120] sm:$0xff]
  %v69 = vld [vmem:[%s0 + $0x128] sm:$0xff]
  %v70 = vld [vmem:[%s0 + $0x130] sm:$0xff]
  %v71 = vld [vmem:[%s0 + $0x138] sm:$0xff]
  %v72 = vld [vmem:[%s0 + $0x140] sm:$0xff]
  %v73 = vld [vmem:[%s0 + $0x148] sm:$0xff]
  %v74 = vld [vmem:[%s0 + $0x150] sm:$0xff]
  %v75 = vld [vmem:[%s0 + $0x158] sm:$0xff]
  %v76 = vld [vmem:[%s0 + $0x160] sm:$0xff]
  %v77 = vld [vmem:[%s0 + $0x168] sm:$0xff]
  %v78 = vld [vmem:[%s0 + $0x170] sm:$0xff]
  %v79 = vld [vmem:[%s0 + $0x178] sm:$0xff]
  %v80 = vld [vmem:[%s0 + $0x180] sm:$0xff]
  %v81 = vld [vmem:[%s0 + $0x188] sm:$0xff]
  %v82 = vld [vmem:[%s0 + $0x190] sm:$0xff]
  %v83 = vld [vmem:[%s0 + $0x198] sm:$0xff]
  %v84 = vld [vmem:[%s0 + $0x1a0] sm:$0xff]
  %v85 = vld [vmem:[%s0 + $0x1a8] sm:$0xff]
  %v86 = vld [vmem:[%s0 + $0x1b0] sm:$0xff]
  %v87 = vld [vmem:[%s0 + $0x1b8] sm:$0xff]
  %v88 = vld [vmem:[%s0 + $0x1c0] sm:$0xff]
  %v89 = vld [vmem:[%s0 + $0x1c8] sm:$0xff]
  %v90 = vld [vmem:[%s0 + $0x1d0] sm:$0xff]
  %v91 = vld [vmem:[%s0 + $0x1d8] sm:$0xff]
  %v92 = vld [vmem:[%s0 + $0x1e0] sm:$0xff]
  %v93 = vld [vmem:[%s0 + $0x1e8] sm:$0xff]
  %v94 = vld [vmem:[%s0 + $0x1f0] sm:$0xff]
  %v95 = vld [vmem:[%s0 + $0x1f8] sm:$0xff]
  %v96 = vld [vmem:[%s1] sm:$0xff]
  %v97 = vld [vmem:[%s1 + $0x8] sm:$0xff]
  %v98 = vld [vmem:[%s1 + $0x10] sm:$0xff]
  %v99 = vld [vmem:[%s1 + $0x18] sm:$0xff]
  %v100 = vld [vmem:[%s1 + $0x20] sm:$0xff]
  %v101 = vld [vmem:[%s1 + $0x28] sm:$0xff]
  %v102 = vld [vmem:[%s1 + $0x30] sm:$0xff]
  %v103 = vld [vmem:[%s1 + $0x38] sm:$0xff]
  %v104 = vld [vmem:[%s1 + $0x40] sm:$0xff]
  %v105 = vld [vmem:[%s1 + $0x48] sm:$0xff]
  %v106 = vld [vmem:[%s1 + $0x50] sm:$0xff]
  %v107 = vld [vmem:[%s1 + $0x58] sm:$0xff]
  %v108 = vld [vmem:[%s1 + $0x60] sm:$0xff]
  %v109 = vld [vmem:[%s1 + $0x68] sm:$0xff]
  %v110 = vld [vmem:[%s1 + $0x70] sm:$0xff]
  %v111 = vld [vmem:[%s1 + $0x78] sm:$0xff]
  %v112 = vld [vmem:[%s1 + $0x80] sm:$0xff]
  %v113 = vld [vmem:[%s1 + $0x88] sm:$0xff]
  %v114 = vld [vmem:[%s1 + $0x90] sm:$0xff]
  %v115 = vld [vmem:[%s1 + $0x98] sm:$0xff]
  %v116 = vld [vmem:[%s1 + $0xa0] sm:$0xff]
  %v117 = vld [vmem:[%s1 + $0xa8] sm:$0xff]
  %v118 = vld [vmem:[%s1 + $0xb0] sm:$0xff]
  %v119 = vld [vmem:[%s1 + $0xb8] sm:$0xff]
  %v120 = vld [vmem:[%s1 + $0xc0] sm:$0xff]
  %v121 = vld [vmem:[%s1 + $0xc8] sm:$0xff]
  %v122 = vld [vmem:[%s1 + $0xd0] sm:$0xff]
  %v123 = vld [vmem:[%s1 + $0xd8] sm:$0xff]
  %v124 = vld [vmem:[%s1 + $0xe0] sm:$0xff]
  %v125 = vld [vmem:[%s1 + $0xe8] sm:$0xff]
  %v126 = vld [vmem:[%s1 + $0xf0] sm:$0xff]
  %v127 = vld [vmem:[%s1 + $0xf8] sm:$0xff]
  %v128 = vld [vmem:[%s1 + $0x100] sm:$0xff]
  %v129 = vld [vmem:[%s1 + $0x108] sm:$0xff]
  %v130 = vld [vmem:[%s1 + $0x110] sm:$0xff]
  %v131 = vld [vmem:[%s1 + $0x118] sm:$0xff]
  %v132 = vld [vmem:[%s1 + $0x120] sm:$0xff]
  %v133 = vld [vmem:[%s1 + $0x128] sm:$0xff]
  %v134 = vld [vmem:[%s1 + $0x130] sm:$0xff]
  %v135 = vld [vmem:[%s1 + $0x138] sm:$0xff]
  %v136 = vld [vmem:[%s1 + $0x140] sm:$0xff]
  %v137 = vld [vmem:[%s1 + $0x148] sm:$0xff]
  %v138 = vld [vmem:[%s1 + $0x150] sm:$0xff]
  %v139 = vld [vmem:[%s1 + $0x158] sm:$0xff]
  %v140 = vld [vmem:[%s1 + $0x160] sm:$0xff]
  %v141 = vld [vmem:[%s1 + $0x168] sm:$0xff]
  %v142 = vld [vmem:[%s1 + $0x170] sm:$0xff]
  %v143 = vld [vmem:[%s1 + $0x178] sm:$0xff]
  %v144 = vld [vmem:[%s1 + $0x180] sm:$0xff]
  %v145 = vld [vmem:[%s1 + $0x188] sm:$0xff]
  %v146 = vld [vmem:[%s1 + $0x190] sm:$0xff]
  %v147 = vld [vmem:[%s1 + $0x198] sm:$0xff]
  %v148 = vld [vmem:[%s1 + $0x1a0] sm:$0xff]
  %v149 = vld [vmem:[%s1 + $0x1a8] sm:$0xff]
  %v150 = vld [vmem:[%s1 + $0x1b0] sm:$0xff]
  %v151 = vld [vmem:[%s1 + $0x1b8] sm:$0xff]
  %v152 = vld [vmem:[%s1 + $0x1c0] sm:$0xff]
  %v153 = vld [vmem:[%s1 + $0x1c8] sm:$0xff]
  %v154 = vld [vmem:[%s1 + $0x1d0] sm:$0xff]
  %v155 = vld [vmem:[%s1 + $0x1d8] sm:$0xff]
  %v156 = vld [vmem:[%s1 + $0x1e0] sm:$0xff]
  %v157 = vld [vmem:[%s1 + $0x1e8] sm:$0xff]
  %v158 = vld [vmem:[%s1 + $0x1f0] sm:$0xff]
  %v159 = vld [vmem:[%s1 + $0x1f8] sm:$0xff]
  %v160 = vld [vmem:[%s1 + $0x200] sm:$0xff]
  %v161 = vld [vmem:[%s1 + $0x208] sm:$0xff]
  %v162 = vld [vmem:[%s1 + $0x210] sm:$0xff]
  %v163 = vld [vmem:[%s1 + $0x218] sm:$0xff]
  %v164 = vld [vmem:[%s1 + $0x220] sm:$0xff]
  %v165 = vld [vmem:[%s1 + $0x228] sm:$0xff]
  %v166 = vld [vmem:[%s1 + $0x230] sm:$0xff]
  %v167 = vld [vmem:[%s1 + $0x238] sm:$0xff]
  %v168 = vld [vmem:[%s1 + $0x240] sm:$0xff]
  %v169 = vld [vmem:[%s1 + $0x248] sm:$0xff]
  %v170 = vld [vmem:[%s1 + $0x250] sm:$0xff]
  %v171 = vld [vmem:[%s1 + $0x258] sm:$0xff]
  %v172 = vld [vmem:[%s1 + $0x260] sm:$0xff]
  %v173 = vld [vmem:[%s1 + $0x268] sm:$0xff]
  %v174 = vld [vmem:[%s1 + $0x270] sm:$0xff]
  %v175 = vld [vmem:[%s1 + $0x278] sm:$0xff]
  %v176 = vld [vmem:[%s1 + $0x280] sm:$0xff]
  %v177 = vld [vmem:[%s1 + $0x288] sm:$0xff]
  %v178 = vld [vmem:[%s1 + $0x290] sm:$0xff]
  %v179 = vld [vmem:[%s1 + $0x298] sm:$0xff]
  %v180 = vld [vmem:[%s1 + $0x2a0] sm:$0xff]
  %v181 = vld [vmem:[%s1 + $0x2a8] sm:$0xff]
  %v182 = vld [vmem:[%s1 + $0x2b0] sm:$0xff]
  %v183 = vld [vmem:[%s1 + $0x2b8] sm:$0xff]
  %v184 = vld [vmem:[%s1 + $0x2c0] sm:$0xff]
  %v185 = vld [vmem:[%s1 + $0x2c8] sm:$0xff]
  %v186 = vld [vmem:[%s1 + $0x2d0] sm:$0xff]
  %v187 = vld [vmem:[%s1 + $0x2d8] sm:$0xff]
  %v188 = vld [vmem:[%s1 + $0x2e0] sm:$0xff]
  %v189 = vld [vmem:[%s1 + $0x2e8] sm:$0xff]
  %v190 = vld [vmem:[%s1 + $0x2f0] sm:$0xff]
  %v191 = vld [vmem:[%s1 + $0x2f8] sm:$0xff]
  %v192 = vld [vmem:[%s1 + $0x300] sm:$0xff]
  %v193 = vld [vmem:[%s1 + $0x308] sm:$0xff]
  %v194 = vld [vmem:[%s1 + $0x310] sm:$0xff]
  %v195 = vld [vmem:[%s1 + $0x318] sm:$0xff]
  %v196 = vld [vmem:[%s1 + $0x320] sm:$0xff]
  %v197 = vld [vmem:[%s1 + $0x328] sm:$0xff]
  %v198 = vld [vmem:[%s1 + $0x330] sm:$0xff]
  %v199 = vld [vmem:[%s1 + $0x338] sm:$0xff]
  %v200 = vld [vmem:[%s1 + $0x340] sm:$0xff]
  %v201 = vld [vmem:[%s1 + $0x348] sm:$0xff]
  %v202 = vld [vmem:[%s1 + $0x350] sm:$0xff]
  %v203 = vld [vmem:[%s1 + $0x358] sm:$0xff]
  %v204 = vld [vmem:[%s1 + $0x360] sm:$0xff]
  %v205 = vld [vmem:[%s1 + $0x368] sm:$0xff]
  %v206 = vld [vmem:[%s1 + $0x370] sm:$0xff]
  %v207 = vld [vmem:[%s1 + $0x378] sm:$0xff]
  %v208 = vld [vmem:[%s1 + $0x380] sm:$0xff]
  %v209 = vld [vmem:[%s1 + $0x388] sm:$0xff]
  %v210 = vld [vmem:[%s1 + $0x390] sm:$0xff]
  %v211 = vld [vmem:[%s1 + $0x398] sm:$0xff]
  %v212 = vld [vmem:[%s1 + $0x3a0] sm:$0xff]
  %v213 = vld [vmem:[%s1 + $0x3a8] sm:$0xff]
  %v214 = vld [vmem:[%s1 + $0x3b0] sm:$0xff]
  %v215 = vld [vmem:[%s1 + $0x3b8] sm:$0xff]
  %v216 = vld [vmem:[%s1 + $0x3c0] sm:$0xff]
  %v217 = vld [vmem:[%s1 + $0x3c8] sm:$0xff]
  %v218 = vld [vmem:[%s1 + $0x3d0] sm:$0xff]
  %v219 = vld [vmem:[%s1 + $0x3d8] sm:$0xff]
  %v220 = vld [vmem:[%s1 + $0x3e0] sm:$0xff]
  %v221 = vld [vmem:[%s1 + $0x3e8] sm:$0xff]
  %v222 = vld [vmem:[%s1 + $0x3f0] sm:$0xff]
  %v223 = vld [vmem:[%s1 + $0x3f8] sm:$0xff]
  %v224 = vld [vmem:[%s2] sm:$0x1]
  %v226 = vlaneseq
  %v227 = vshrl.u32 %v226, 7
  %v228 = vsub.s32 0, %v227
  %v229 = vrot.slane %v224, %v228
  %231 = vmatprep.subr.mxu0 0.0
  %232 = vmatpush1.msra.mxu0 %v111
  %233 = vmatprep.subr.mxu0 0.0
  %234 = vmatpush1.msra.mxu0 %v110
  %235 = vmatprep.subr.mxu0 0.0
  %236 = vmatpush1.msra.mxu0 %v109
  %237 = vmatprep.subr.mxu0 0.0
  %238 = vmatpush1.msra.mxu0 %v108
  %239 = vmatprep.subr.mxu0 0.0
  %240 = vmatpush1.msra.mxu0 %v107
  %241 = vmatprep.subr.mxu0 0.0
  %242 = vmatpush1.msra.mxu0 %v106
  %243 = vmatprep.subr.mxu0 0.0
  %244 = vmatpush1.msra.mxu0 %v105
  %245 = vmatprep.subr.mxu0 0.0
  %246 = vmatpush1.msra.mxu0 %v104
  %247 = vmatprep.subr.mxu0 0.0
  %248 = vmatpush1.msra.mxu0 %v103
  %249 = vmatprep.subr.mxu0 0.0
  %250 = vmatpush1.msra.mxu0 %v102
  %251 = vmatprep.subr.mxu0 0.0
  %252 = vmatpush1.msra.mxu0 %v101
  %253 = vmatprep.subr.mxu0 0.0
  %254 = vmatpush1.msra.mxu0 %v100
  %255 = vmatprep.subr.mxu0 0.0
  %256 = vmatpush1.msra.mxu0 %v99
  %257 = vmatprep.subr.mxu0 0.0
  %258 = vmatpush1.msra.mxu0 %v98
  %259 = vmatprep.subr.mxu0 0.0
  %260 = vmatpush1.msra.mxu0 %v97
  %261 = vmatprep.subr.mxu0 0.0
  %262 = vmatpush1.msra.mxu0 %v96
  %263 = vmatprep.subr.mxu0 0.0
  %264 = vmatpush2.msra.mxu0 %v127
  %265 = vmatprep.subr.mxu0 0.0
  %266 = vmatpush2.msra.mxu0 %v126
  %267 = vmatprep.subr.mxu0 0.0
  %268 = vmatpush2.msra.mxu0 %v125
  %269 = vmatprep.subr.mxu0 0.0
  %270 = vmatpush2.msra.mxu0 %v124
  %271 = vmatprep.subr.mxu0 0.0
  %272 = vmatpush2.msra.mxu0 %v123
  %273 = vmatprep.subr.mxu0 0.0
  %274 = vmatpush2.msra.mxu0 %v122
  %275 = vmatprep.subr.mxu0 0.0
  %276 = vmatpush2.msra.mxu0 %v121
  %277 = vmatprep.subr.mxu0 0.0
  %278 = vmatpush2.msra.mxu0 %v120
  %279 = vmatprep.subr.mxu0 0.0
  %280 = vmatpush2.msra.mxu0 %v119
  %281 = vmatprep.subr.mxu0 0.0
  %282 = vmatpush2.msra.mxu0 %v118
  %283 = vmatprep.subr.mxu0 0.0
  %284 = vmatpush2.msra.mxu0 %v117
  %285 = vmatprep.subr.mxu0 0.0
  %286 = vmatpush2.msra.mxu0 %v116
  %287 = vmatprep.subr.mxu0 0.0
  %288 = vmatpush2.msra.mxu0 %v115
  %289 = vmatprep.subr.mxu0 0.0
  %290 = vmatpush2.msra.mxu0 %v114
  %291 = vmatprep.subr.mxu0 0.0
  %292 = vmatpush2.msra.mxu0 %v113
  %293 = vmatprep.subr.mxu0 0.0
  %294 = vmatpush2.msra.mxu0 %v112
  %295 = vmatprep.mubr.f32.mxu0 %v33
  %296 = vmatmul.mubr.f32.gmra.mxu0 %v32
  %v297 = vpop.f32.mrf.mxu0
  %v298 = vadd.f32 %v229, %v297
  %v299 = vpop.f32.mrf.mxu0
  %300 = vmatprep.mubr.f32.mxu0 %v41
  %301 = vmatmul.mubr.f32.gmra.mxu0 %v40
  %v302 = vpop.f32.mrf.mxu0
  %v303 = vadd.f32 %v229, %v302
  %v304 = vpop.f32.mrf.mxu0
  %305 = vmatprep.mubr.f32.mxu0 %v49
  %306 = vmatmul.mubr.f32.gmra.mxu0 %v48
  %v307 = vpop.f32.mrf.mxu0
  %v308 = vadd.f32 %v229, %v307
  %v309 = vpop.f32.mrf.mxu0
  %310 = vmatprep.mubr.f32.mxu0 %v57
  %311 = vmatmul.mubr.f32.gmra.mxu0 %v56
  %v312 = vpop.f32.mrf.mxu0
  %v313 = vadd.f32 %v229, %v312
  %v314 = vpop.f32.mrf.mxu0
  %315 = vmatprep.mubr.f32.mxu0 %v65
  %316 = vmatmul.mubr.f32.gmra.mxu0 %v64
  %v317 = vpop.f32.mrf.mxu0
  %v318 = vadd.f32 %v229, %v317
  %v319 = vpop.f32.mrf.mxu0
  %320 = vmatprep.mubr.f32.mxu0 %v73
  %321 = vmatmul.mubr.f32.gmra.mxu0 %v72
  %v322 = vpop.f32.mrf.mxu0
  %v323 = vadd.f32 %v229, %v322
  %v324 = vpop.f32.mrf.mxu0
  %325 = vmatprep.mubr.f32.mxu0 %v81
  %326 = vmatmul.mubr.f32.gmra.mxu0 %v80
  %v327 = vpop.f32.mrf.mxu0
  %v328 = vadd.f32 %v229, %v327
  %v329 = vpop.f32.mrf.mxu0
  %330 = vmatprep.mubr.f32.mxu0 %v89
  %331 = vmatmul.mubr.f32.gmra.mxu0 %v88
  %v332 = vpop.f32.mrf.mxu0
  %v333 = vadd.f32 %v229, %v332
  %v334 = vpop.f32.mrf.mxu0
  %335 = vdwg.mxu0
  %336 = vmatprep.subr.mxu0 0.0
  %337 = vmatpush1.msra.mxu0 %v143
  %338 = vmatprep.subr.mxu0 0.0
  %339 = vmatpush1.msra.mxu0 %v142
  %340 = vmatprep.subr.mxu0 0.0
  %341 = vmatpush1.msra.mxu0 %v141
  %342 = vmatprep.subr.mxu0 0.0
  %343 = vmatpush1.msra.mxu0 %v140
  %344 = vmatprep.subr.mxu0 0.0
  %345 = vmatpush1.msra.mxu0 %v139
  %346 = vmatprep.subr.mxu0 0.0
  %347 = vmatpush1.msra.mxu0 %v138
  %348 = vmatprep.subr.mxu0 0.0
  %349 = vmatpush1.msra.mxu0 %v137
  %350 = vmatprep.subr.mxu0 0.0
  %351 = vmatpush1.msra.mxu0 %v136
  %352 = vmatprep.subr.mxu0 0.0
  %353 = vmatpush1.msra.mxu0 %v135
  %354 = vmatprep.subr.mxu0 0.0
  %355 = vmatpush1.msra.mxu0 %v134
  %356 = vmatprep.subr.mxu0 0.0
  %357 = vmatpush1.msra.mxu0 %v133
  %358 = vmatprep.subr.mxu0 0.0
  %359 = vmatpush1.msra.mxu0 %v132
  %360 = vmatprep.subr.mxu0 0.0
  %361 = vmatpush1.msra.mxu0 %v131
  %362 = vmatprep.subr.mxu0 0.0
  %363 = vmatpush1.msra.mxu0 %v130
  %364 = vmatprep.subr.mxu0 0.0
  %365 = vmatpush1.msra.mxu0 %v129
  %366 = vmatprep.subr.mxu0 0.0
  %367 = vmatpush1.msra.mxu0 %v128
  %368 = vmatprep.subr.mxu0 0.0
  %369 = vmatpush2.msra.mxu0 %v159
  %370 = vmatprep.subr.mxu0 0.0
  %371 = vmatpush2.msra.mxu0 %v158
  %372 = vmatprep.subr.mxu0 0.0
  %373 = vmatpush2.msra.mxu0 %v157
  %374 = vmatprep.subr.mxu0 0.0
  %375 = vmatpush2.msra.mxu0 %v156
  %376 = vmatprep.subr.mxu0 0.0
  %377 = vmatpush2.msra.mxu0 %v155
  %378 = vmatprep.subr.mxu0 0.0
  %379 = vmatpush2.msra.mxu0 %v154
  %380 = vmatprep.subr.mxu0 0.0
  %381 = vmatpush2.msra.mxu0 %v153
  %382 = vmatprep.subr.mxu0 0.0
  %383 = vmatpush2.msra.mxu0 %v152
  %384 = vmatprep.subr.mxu0 0.0
  %385 = vmatpush2.msra.mxu0 %v151
  %386 = vmatprep.subr.mxu0 0.0
  %387 = vmatpush2.msra.mxu0 %v150
  %388 = vmatprep.subr.mxu0 0.0
  %389 = vmatpush2.msra.mxu0 %v149
  %390 = vmatprep.subr.mxu0 0.0
  %391 = vmatpush2.msra.mxu0 %v148
  %392 = vmatprep.subr.mxu0 0.0
  %393 = vmatpush2.msra.mxu0 %v147
  %394 = vmatprep.subr.mxu0 0.0
  %395 = vmatpush2.msra.mxu0 %v146
  %396 = vmatprep.subr.mxu0 0.0
  %397 = vmatpush2.msra.mxu0 %v145
  %398 = vmatprep.subr.mxu0 0.0
  %399 = vmatpush2.msra.mxu0 %v144
  %400 = vmatprep.mubr.f32.mxu0 %v35
  %401 = vmatmul.mubr.f32.gmra.mxu0 %v34
  %v402 = vpop.f32.mrf.mxu0
  %v403 = vadd.f32 %v298, %v402
  %v404 = vpop.f32.mrf.mxu0
  %405 = vmatprep.mubr.f32.mxu0 %v43
  %406 = vmatmul.mubr.f32.gmra.mxu0 %v42
  %v407 = vpop.f32.mrf.mxu0
  %v408 = vadd.f32 %v303, %v407
  %v409 = vpop.f32.mrf.mxu0
  %410 = vmatprep.mubr.f32.mxu0 %v51
  %411 = vmatmul.mubr.f32.gmra.mxu0 %v50
  %v412 = vpop.f32.mrf.mxu0
  %v413 = vadd.f32 %v308, %v412
  %v414 = vpop.f32.mrf.mxu0
  %415 = vmatprep.mubr.f32.mxu0 %v59
  %416 = vmatmul.mubr.f32.gmra.mxu0 %v58
  %v417 = vpop.f32.mrf.mxu0
  %v418 = vadd.f32 %v313, %v417
  %v419 = vpop.f32.mrf.mxu0
  %420 = vmatprep.mubr.f32.mxu0 %v67
  %421 = vmatmul.mubr.f32.gmra.mxu0 %v66
  %v422 = vpop.f32.mrf.mxu0
  %v423 = vadd.f32 %v318, %v422
  %v424 = vpop.f32.mrf.mxu0
  %425 = vmatprep.mubr.f32.mxu0 %v75
  %426 = vmatmul.mubr.f32.gmra.mxu0 %v74
  %v427 = vpop.f32.mrf.mxu0
  %v428 = vadd.f32 %v323, %v427
  %v429 = vpop.f32.mrf.mxu0
  %430 = vmatprep.mubr.f32.mxu0 %v83
  %431 = vmatmul.mubr.f32.gmra.mxu0 %v82
  %v432 = vpop.f32.mrf.mxu0
  %v433 = vadd.f32 %v328, %v432
  %v434 = vpop.f32.mrf.mxu0
  %435 = vmatprep.mubr.f32.mxu0 %v91
  %436 = vmatmul.mubr.f32.gmra.mxu0 %v90
  %v437 = vpop.f32.mrf.mxu0
  %v438 = vadd.f32 %v333, %v437
  %v439 = vpop.f32.mrf.mxu0
  %440 = vdwg.mxu0
  %441 = vmatprep.subr.mxu0 0.0
  %442 = vmatpush1.msra.mxu0 %v175
  %443 = vmatprep.subr.mxu0 0.0
  %444 = vmatpush1.msra.mxu0 %v174
  %445 = vmatprep.subr.mxu0 0.0
  %446 = vmatpush1.msra.mxu0 %v173
  %447 = vmatprep.subr.mxu0 0.0
  %448 = vmatpush1.msra.mxu0 %v172
  %449 = vmatprep.subr.mxu0 0.0
  %450 = vmatpush1.msra.mxu0 %v171
  %451 = vmatprep.subr.mxu0 0.0
  %452 = vmatpush1.msra.mxu0 %v170
  %453 = vmatprep.subr.mxu0 0.0
  %454 = vmatpush1.msra.mxu0 %v169
  %455 = vmatprep.subr.mxu0 0.0
  %456 = vmatpush1.msra.mxu0 %v168
  %457 = vmatprep.subr.mxu0 0.0
  %458 = vmatpush1.msra.mxu0 %v167
  %459 = vmatprep.subr.mxu0 0.0
  %460 = vmatpush1.msra.mxu0 %v166
  %461 = vmatprep.subr.mxu0 0.0
  %462 = vmatpush1.msra.mxu0 %v165
  %463 = vmatprep.subr.mxu0 0.0
  %464 = vmatpush1.msra.mxu0 %v164
  %465 = vmatprep.subr.mxu0 0.0
  %466 = vmatpush1.msra.mxu0 %v163
  %467 = vmatprep.subr.mxu0 0.0
  %468 = vmatpush1.msra.mxu0 %v162
  %469 = vmatprep.subr.mxu0 0.0
  %470 = vmatpush1.msra.mxu0 %v161
  %471 = vmatprep.subr.mxu0 0.0
  %472 = vmatpush1.msra.mxu0 %v160
  %473 = vmatprep.subr.mxu0 0.0
  %474 = vmatpush2.msra.mxu0 %v191
  %475 = vmatprep.subr.mxu0 0.0
  %476 = vmatpush2.msra.mxu0 %v190
  %477 = vmatprep.subr.mxu0 0.0
  %478 = vmatpush2.msra.mxu0 %v189
  %479 = vmatprep.subr.mxu0 0.0
  %480 = vmatpush2.msra.mxu0 %v188
  %481 = vmatprep.subr.mxu0 0.0
  %482 = vmatpush2.msra.mxu0 %v187
  %483 = vmatprep.subr.mxu0 0.0
  %484 = vmatpush2.msra.mxu0 %v186
  %485 = vmatprep.subr.mxu0 0.0
  %486 = vmatpush2.msra.mxu0 %v185
  %487 = vmatprep.subr.mxu0 0.0
  %488 = vmatpush2.msra.mxu0 %v184
  %489 = vmatprep.subr.mxu0 0.0
  %490 = vmatpush2.msra.mxu0 %v183
  %491 = vmatprep.subr.mxu0 0.0
  %492 = vmatpush2.msra.mxu0 %v182
  %493 = vmatprep.subr.mxu0 0.0
  %494 = vmatpush2.msra.mxu0 %v181
  %495 = vmatprep.subr.mxu0 0.0
  %496 = vmatpush2.msra.mxu0 %v180
  %497 = vmatprep.subr.mxu0 0.0
  %498 = vmatpush2.msra.mxu0 %v179
  %499 = vmatprep.subr.mxu0 0.0
  %500 = vmatpush2.msra.mxu0 %v178
  %501 = vmatprep.subr.mxu0 0.0
  %502 = vmatpush2.msra.mxu0 %v177
  %503 = vmatprep.subr.mxu0 0.0
  %504 = vmatpush2.msra.mxu0 %v176
  %505 = vmatprep.mubr.f32.mxu0 %v37
  %506 = vmatmul.mubr.f32.gmra.mxu0 %v36
  %v507 = vpop.f32.mrf.mxu0
  %v508 = vadd.f32 %v403, %v507
  %v509 = vpop.f32.mrf.mxu0
  %510 = vmatprep.mubr.f32.mxu0 %v45
  %511 = vmatmul.mubr.f32.gmra.mxu0 %v44
  %v512 = vpop.f32.mrf.mxu0
  %v513 = vadd.f32 %v408, %v512
  %v514 = vpop.f32.mrf.mxu0
  %515 = vmatprep.mubr.f32.mxu0 %v53
  %516 = vmatmul.mubr.f32.gmra.mxu0 %v52
  %v517 = vpop.f32.mrf.mxu0
  %v518 = vadd.f32 %v413, %v517
  %v519 = vpop.f32.mrf.mxu0
  %520 = vmatprep.mubr.f32.mxu0 %v61
  %521 = vmatmul.mubr.f32.gmra.mxu0 %v60
  %v522 = vpop.f32.mrf.mxu0
  %v523 = vadd.f32 %v418, %v522
  %v524 = vpop.f32.mrf.mxu0
  %525 = vmatprep.mubr.f32.mxu0 %v69
  %526 = vmatmul.mubr.f32.gmra.mxu0 %v68
  %v527 = vpop.f32.mrf.mxu0
  %v528 = vadd.f32 %v423, %v527
  %v529 = vpop.f32.mrf.mxu0
  %530 = vmatprep.mubr.f32.mxu0 %v77
  %531 = vmatmul.mubr.f32.gmra.mxu0 %v76
  %v532 = vpop.f32.mrf.mxu0
  %v533 = vadd.f32 %v428, %v532
  %v534 = vpop.f32.mrf.mxu0
  %535 = vmatprep.mubr.f32.mxu0 %v85
  %536 = vmatmul.mubr.f32.gmra.mxu0 %v84
  %v537 = vpop.f32.mrf.mxu0
  %v538 = vadd.f32 %v433, %v537
  %v539 = vpop.f32.mrf.mxu0
  %540 = vmatprep.mubr.f32.mxu0 %v93
  %541 = vmatmul.mubr.f32.gmra.mxu0 %v92
  %v542 = vpop.f32.mrf.mxu0
  %v543 = vadd.f32 %v438, %v542
  %v544 = vpop.f32.mrf.mxu0
  %545 = vdwg.mxu0
  %546 = vmatprep.subr.mxu0 0.0
  %547 = vmatpush1.msra.mxu0 %v207
  %548 = vmatprep.subr.mxu0 0.0
  %549 = vmatpush1.msra.mxu0 %v206
  %550 = vmatprep.subr.mxu0 0.0
  %551 = vmatpush1.msra.mxu0 %v205
  %552 = vmatprep.subr.mxu0 0.0
  %553 = vmatpush1.msra.mxu0 %v204
  %554 = vmatprep.subr.mxu0 0.0
  %555 = vmatpush1.msra.mxu0 %v203
  %556 = vmatprep.subr.mxu0 0.0
  %557 = vmatpush1.msra.mxu0 %v202
  %558 = vmatprep.subr.mxu0 0.0
  %559 = vmatpush1.msra.mxu0 %v201
  %560 = vmatprep.subr.mxu0 0.0
  %561 = vmatpush1.msra.mxu0 %v200
  %562 = vmatprep.subr.mxu0 0.0
  %563 = vmatpush1.msra.mxu0 %v199
  %564 = vmatprep.subr.mxu0 0.0
  %565 = vmatpush1.msra.mxu0 %v198
  %566 = vmatprep.subr.mxu0 0.0
  %567 = vmatpush1.msra.mxu0 %v197
  %568 = vmatprep.subr.mxu0 0.0
  %569 = vmatpush1.msra.mxu0 %v196
  %570 = vmatprep.subr.mxu0 0.0
  %571 = vmatpush1.msra.mxu0 %v195
  %572 = vmatprep.subr.mxu0 0.0
  %573 = vmatpush1.msra.mxu0 %v194
  %574 = vmatprep.subr.mxu0 0.0
  %575 = vmatpush1.msra.mxu0 %v193
  %576 = vmatprep.subr.mxu0 0.0
  %577 = vmatpush1.msra.mxu0 %v192
  %578 = vmatprep.subr.mxu0 0.0
  %579 = vmatpush2.msra.mxu0 %v223
  %580 = vmatprep.subr.mxu0 0.0
  %581 = vmatpush2.msra.mxu0 %v222
  %582 = vmatprep.subr.mxu0 0.0
  %583 = vmatpush2.msra.mxu0 %v221
  %584 = vmatprep.subr.mxu0 0.0
  %585 = vmatpush2.msra.mxu0 %v220
  %586 = vmatprep.subr.mxu0 0.0
  %587 = vmatpush2.msra.mxu0 %v219
  %588 = vmatprep.subr.mxu0 0.0
  %589 = vmatpush2.msra.mxu0 %v218
  %590 = vmatprep.subr.mxu0 0.0
  %591 = vmatpush2.msra.mxu0 %v217
  %592 = vmatprep.subr.mxu0 0.0
  %593 = vmatpush2.msra.mxu0 %v216
  %594 = vmatprep.subr.mxu0 0.0
  %595 = vmatpush2.msra.mxu0 %v215
  %596 = vmatprep.subr.mxu0 0.0
  %597 = vmatpush2.msra.mxu0 %v214
  %598 = vmatprep.subr.mxu0 0.0
  %599 = vmatpush2.msra.mxu0 %v213
  %600 = vmatprep.subr.mxu0 0.0
  %601 = vmatpush2.msra.mxu0 %v212
  %602 = vmatprep.subr.mxu0 0.0
  %603 = vmatpush2.msra.mxu0 %v211
  %604 = vmatprep.subr.mxu0 0.0
  %605 = vmatpush2.msra.mxu0 %v210
  %606 = vmatprep.subr.mxu0 0.0
  %607 = vmatpush2.msra.mxu0 %v209
  %608 = vmatprep.subr.mxu0 0.0
  %609 = vmatpush2.msra.mxu0 %v208
  %610 = vmatprep.mubr.f32.mxu0 %v39
  %611 = vmatmul.mubr.f32.gmra.mxu0 %v38
  %v612 = vpop.f32.mrf.mxu0
  %v613 = vadd.f32 %v508, %v612
  %v614 = vpop.f32.mrf.mxu0
  %615 = vmatprep.mubr.f32.mxu0 %v47
  %616 = vmatmul.mubr.f32.gmra.mxu0 %v46
  %v617 = vpop.f32.mrf.mxu0
  %v618 = vadd.f32 %v513, %v617
  %v619 = vpop.f32.mrf.mxu0
  %620 = vmatprep.mubr.f32.mxu0 %v55
  %621 = vmatmul.mubr.f32.gmra.mxu0 %v54
  %v622 = vpop.f32.mrf.mxu0
  %v623 = vadd.f32 %v518, %v622
  %v624 = vpop.f32.mrf.mxu0
  %625 = vmatprep.mubr.f32.mxu0 %v63
  %626 = vmatmul.mubr.f32.gmra.mxu0 %v62
  %v627 = vpop.f32.mrf.mxu0
  %v628 = vadd.f32 %v523, %v627
  %v629 = vpop.f32.mrf.mxu0
  %630 = vmatprep.mubr.f32.mxu0 %v71
  %631 = vmatmul.mubr.f32.gmra.mxu0 %v70
  %v632 = vpop.f32.mrf.mxu0
  %v633 = vadd.f32 %v528, %v632
  %v634 = vpop.f32.mrf.mxu0
  %635 = vmatprep.mubr.f32.mxu0 %v79
  %636 = vmatmul.mubr.f32.gmra.mxu0 %v78
  %v637 = vpop.f32.mrf.mxu0
  %v638 = vadd.f32 %v533, %v637
  %v639 = vpop.f32.mrf.mxu0
  %640 = vmatprep.mubr.f32.mxu0 %v87
  %641 = vmatmul.mubr.f32.gmra.mxu0 %v86
  %v642 = vpop.f32.mrf.mxu0
  %v643 = vadd.f32 %v538, %v642
  %v644 = vpop.f32.mrf.mxu0
  %645 = vmatprep.mubr.f32.mxu0 %v95
  %646 = vmatmul.mubr.f32.gmra.mxu0 %v94
  %v647 = vpop.f32.mrf.mxu0
  %v648 = vadd.f32 %v543, %v647
  %v649 = vpop.f32.mrf.mxu0
  %650 = vdwg.mxu0
  %v651 = vld [vmem:[%s3] sm:$0xff]
  %v652 = vld [vmem:[%s3 + $0x8] sm:$0xff]
  %v653 = vld [vmem:[%s3 + $0x10] sm:$0xff]
  %v654 = vld [vmem:[%s3 + $0x18] sm:$0xff]
  %v655 = vld [vmem:[%s4] sm:$0xff]
  %v656 = vld [vmem:[%s4 + $0x8] sm:$0xff]
  %v657 = vld [vmem:[%s4 + $0x10] sm:$0xff]
  %v658 = vld [vmem:[%s4 + $0x18] sm:$0xff]
  %v659 = vld [vmem:[%s4 + $0x20] sm:$0xff]
  %v660 = vld [vmem:[%s4 + $0x28] sm:$0xff]
  %v661 = vld [vmem:[%s4 + $0x30] sm:$0xff]
  %v662 = vld [vmem:[%s4 + $0x38] sm:$0xff]
  %v663 = vld [vmem:[%s5] sm:$0x1]
  %vm664 = vcmask 261120
  %v666 = vsel %vm664, 0.0, 0
  %668 = vmatprep.subr.mxu0 0.0
  %669 = vmatpush1.msra.mxu0 0.0
  %670 = vmatprep.subr.mxu0 0.0
  %671 = vmatpush1.msra.mxu0 0.0
  %672 = vmatprep.subr.mxu0 0.0
  %673 = vmatpush1.msra.mxu0 0.0
  %674 = vmatprep.subr.mxu0 0.0
  %675 = vmatpush1.msra.mxu0 0.0
  %676 = vmatprep.subr.mxu0 0.0
  %677 = vmatpush1.msra.mxu0 0.0
  %678 = vmatprep.subr.mxu0 0.0
  %679 = vmatpush1.msra.mxu0 0.0
  %680 = vmatprep.subr.mxu0 0.0
  %681 = vmatpush1.msra.mxu0 0.0
  %682 = vmatprep.subr.mxu0 0.0
  %683 = vmatpush1.msra.mxu0 0.0
  %684 = vmatprep.subr.mxu0 0.0
  %685 = vmatpush1.msra.mxu0 0.0
  %686 = vmatprep.subr.mxu0 0.0
  %687 = vmatpush1.msra.mxu0 0.0
  %688 = vmatprep.subr.mxu0 0.0
  %689 = vmatpush1.msra.mxu0 0.0
  %690 = vmatprep.subr.mxu0 0.0
  %691 = vmatpush1.msra.mxu0 0.0
  %692 = vmatprep.subr.mxu0 0.0
  %693 = vmatpush1.msra.mxu0 %v654
  %694 = vmatprep.subr.mxu0 0.0
  %695 = vmatpush1.msra.mxu0 %v653
  %696 = vmatprep.subr.mxu0 0.0
  %697 = vmatpush1.msra.mxu0 %v652
  %698 = vmatprep.subr.mxu0 0.0
  %699 = vmatpush1.msra.mxu0 %v651
  %700 = vmatprep.subr.mxu0 0.0
  %701 = vmatpush2.msra.mxu0 0.0
  %702 = vmatprep.subr.mxu0 0.0
  %703 = vmatpush2.msra.mxu0 0.0
  %704 = vmatprep.subr.mxu0 0.0
  %705 = vmatpush2.msra.mxu0 0.0
  %706 = vmatprep.subr.mxu0 0.0
  %707 = vmatpush2.msra.mxu0 0.0
  %708 = vmatprep.subr.mxu0 0.0
  %709 = vmatpush2.msra.mxu0 0.0
  %710 = vmatprep.subr.mxu0 0.0
  %711 = vmatpush2.msra.mxu0 0.0
  %712 = vmatprep.subr.mxu0 0.0
  %713 = vmatpush2.msra.mxu0 0.0
  %714 = vmatprep.subr.mxu0 0.0
  %715 = vmatpush2.msra.mxu0 0.0
  %716 = vmatprep.subr.mxu0 0.0
  %717 = vmatpush2.msra.mxu0 0.0
  %718 = vmatprep.subr.mxu0 0.0
  %719 = vmatpush2.msra.mxu0 0.0
  %720 = vmatprep.subr.mxu0 0.0
  %721 = vmatpush2.msra.mxu0 0.0
  %722 = vmatprep.subr.mxu0 0.0
  %723 = vmatpush2.msra.mxu0 0.0
  %724 = vmatprep.subr.mxu0 0.0
  %725 = vmatpush2.msra.mxu0 0.0
  %726 = vmatprep.subr.mxu0 0.0
  %727 = vmatpush2.msra.mxu0 0.0
  %728 = vmatprep.subr.mxu0 0.0
  %729 = vmatpush2.msra.mxu0 0.0
  %730 = vmatprep.subr.mxu0 0.0
  %731 = vmatpush2.msra.mxu0 0.0
  %732 = vmatprep.mubr.f32.mxu0 0.0
  %733 = vmatmul.mubr.f32.gmra.mxu0 %v666
  %v734 = vpop.f32.mrf.mxu0
  %v735 = vadd.f32 0.0, %v734
  %v736 = vpop.f32.mrf.mxu0
  %737 = vdwg.mxu0
  %v738 = vadd.f32 %v613, %v735
  %v739 = vtanh.pop %v738
  %v740 = vsel %vm664, %v739, 0.0
  %v742 = vlaneseq
  %v743 = vshrl.u32 %v742, 7
  %v744 = vsub.s32 0, %v743
  %v745 = vrot.slane %v663, %v744
  %vm747 = vcmask 523264
  %v749 = vsel %vm747, %v740, 0
  %751 = vmatprep.subr.mxu0 0.0
  %752 = vmatpush1.msra.mxu0 0.0
  %753 = vmatprep.subr.mxu0 0.0
  %754 = vmatpush1.msra.mxu0 0.0
  %755 = vmatprep.subr.mxu0 0.0
  %756 = vmatpush1.msra.mxu0 0.0
  %757 = vmatprep.subr.mxu0 0.0
  %758 = vmatpush1.msra.mxu0 0.0
  %759 = vmatprep.subr.mxu0 0.0
  %760 = vmatpush1.msra.mxu0 0.0
  %761 = vmatprep.subr.mxu0 0.0
  %762 = vmatpush1.msra.mxu0 0.0
  %763 = vmatprep.subr.mxu0 0.0
  %764 = vmatpush1.msra.mxu0 0.0
  %765 = vmatprep.subr.mxu0 0.0
  %766 = vmatpush1.msra.mxu0 0.0
  %767 = vmatprep.subr.mxu0 0.0
  %768 = vmatpush1.msra.mxu0 %v662
  %769 = vmatprep.subr.mxu0 0.0
  %770 = vmatpush1.msra.mxu0 %v661
  %771 = vmatprep.subr.mxu0 0.0
  %772 = vmatpush1.msra.mxu0 %v660
  %773 = vmatprep.subr.mxu0 0.0
  %774 = vmatpush1.msra.mxu0 %v659
  %775 = vmatprep.subr.mxu0 0.0
  %776 = vmatpush1.msra.mxu0 %v658
  %777 = vmatprep.subr.mxu0 0.0
  %778 = vmatpush1.msra.mxu0 %v657
  %779 = vmatprep.subr.mxu0 0.0
  %780 = vmatpush1.msra.mxu0 %v656
  %781 = vmatprep.subr.mxu0 0.0
  %782 = vmatpush1.msra.mxu0 %v655
  %783 = vmatprep.subr.mxu0 0.0
  %784 = vmatpush2.msra.mxu0 0.0
  %785 = vmatprep.subr.mxu0 0.0
  %786 = vmatpush2.msra.mxu0 0.0
  %787 = vmatprep.subr.mxu0 0.0
  %788 = vmatpush2.msra.mxu0 0.0
  %789 = vmatprep.subr.mxu0 0.0
  %790 = vmatpush2.msra.mxu0 0.0
  %791 = vmatprep.subr.mxu0 0.0
  %792 = vmatpush2.msra.mxu0 0.0
  %793 = vmatprep.subr.mxu0 0.0
  %794 = vmatpush2.msra.mxu0 0.0
  %795 = vmatprep.subr.mxu0 0.0
  %796 = vmatpush2.msra.mxu0 0.0
  %797 = vmatprep.subr.mxu0 0.0
  %798 = vmatpush2.msra.mxu0 0.0
  %799 = vmatprep.subr.mxu0 0.0
  %800 = vmatpush2.msra.mxu0 0.0
  %801 = vmatprep.subr.mxu0 0.0
  %802 = vmatpush2.msra.mxu0 0.0
  %803 = vmatprep.subr.mxu0 0.0
  %804 = vmatpush2.msra.mxu0 0.0
  %805 = vmatprep.subr.mxu0 0.0
  %806 = vmatpush2.msra.mxu0 0.0
  %807 = vmatprep.subr.mxu0 0.0
  %808 = vmatpush2.msra.mxu0 0.0
  %809 = vmatprep.subr.mxu0 0.0
  %810 = vmatpush2.msra.mxu0 0.0
  %811 = vmatprep.subr.mxu0 0.0
  %812 = vmatpush2.msra.mxu0 0.0
  %813 = vmatprep.subr.mxu0 0.0
  %814 = vmatpush2.msra.mxu0 0.0
  %815 = vmatprep.mubr.f32.mxu0 0.0
  %816 = vmatmul.mubr.f32.gmra.mxu0 %v749
  %v817 = vpop.f32.mrf.mxu0
  %v818 = vadd.f32 %v745, %v817
  %v819 = vpop.f32.mrf.mxu0
  %820 = vdwg.mxu0
  %v821 = vtanh.pop %v818
  %822 = vst.msk [vmem:[#allocation2] sm:$0xff] %vm664, %v739
  %823 = vst.msk [vmem:[#allocation3] sm:$0xff] %vm664, %v821
  %v825 = vsel %vm664, %v739, 0
  %827 = vmatprep.subr.mxu0 0.0
  %828 = vmatpush1.msra.mxu0 0.0
  %829 = vmatprep.subr.mxu0 0.0
  %830 = vmatpush1.msra.mxu0 0.0
  %831 = vmatprep.subr.mxu0 0.0
  %832 = vmatpush1.msra.mxu0 0.0
  %833 = vmatprep.subr.mxu0 0.0
  %834 = vmatpush1.msra.mxu0 0.0
  %835 = vmatprep.subr.mxu0 0.0
  %836 = vmatpush1.msra.mxu0 0.0
  %837 = vmatprep.subr.mxu0 0.0
  %838 = vmatpush1.msra.mxu0 0.0
  %839 = vmatprep.subr.mxu0 0.0
  %840 = vmatpush1.msra.mxu0 0.0
  %841 = vmatprep.subr.mxu0 0.0
  %842 = vmatpush1.msra.mxu0 0.0
  %843 = vmatprep.subr.mxu0 0.0
  %844 = vmatpush1.msra.mxu0 0.0
  %845 = vmatprep.subr.mxu0 0.0
  %846 = vmatpush1.msra.mxu0 0.0
  %847 = vmatprep.subr.mxu0 0.0
  %848 = vmatpush1.msra.mxu0 0.0
  %849 = vmatprep.subr.mxu0 0.0
  %850 = vmatpush1.msra.mxu0 0.0
  %851 = vmatprep.subr.mxu0 0.0
  %852 = vmatpush1.msra.mxu0 %v654
  %853 = vmatprep.subr.mxu0 0.0
  %854 = vmatpush1.msra.mxu0 %v653
  %855 = vmatprep.subr.mxu0 0.0
  %856 = vmatpush1.msra.mxu0 %v652
  %857 = vmatprep.subr.mxu0 0.0
  %858 = vmatpush1.msra.mxu0 %v651
  %859 = vmatprep.subr.mxu0 0.0
  %860 = vmatpush2.msra.mxu0 0.0
  %861 = vmatprep.subr.mxu0 0.0
  %862 = vmatpush2.msra.mxu0 0.0
  %863 = vmatprep.subr.mxu0 0.0
  %864 = vmatpush2.msra.mxu0 0.0
  %865 = vmatprep.subr.mxu0 0.0
  %866 = vmatpush2.msra.mxu0 0.0
  %867 = vmatprep.subr.mxu0 0.0
  %868 = vmatpush2.msra.mxu0 0.0
  %869 = vmatprep.subr.mxu0 0.0
  %870 = vmatpush2.msra.mxu0 0.0
  %871 = vmatprep.subr.mxu0 0.0
  %872 = vmatpush2.msra.mxu0 0.0
  %873 = vmatprep.subr.mxu0 0.0
  %874 = vmatpush2.msra.mxu0 0.0
  %875 = vmatprep.subr.mxu0 0.0
  %876 = vmatpush2.msra.mxu0 0.0
  %877 = vmatprep.subr.mxu0 0.0
  %878 = vmatpush2.msra.mxu0 0.0
  %879 = vmatprep.subr.mxu0 0.0
  %880 = vmatpush2.msra.mxu0 0.0
  %881 = vmatprep.subr.mxu0 0.0
  %882 = vmatpush2.msra.mxu0 0.0
  %883 = vmatprep.subr.mxu0 0.0
  %884 = vmatpush2.msra.mxu0 0.0
  %885 = vmatprep.subr.mxu0 0.0
  %886 = vmatpush2.msra.mxu0 0.0
  %887 = vmatprep.subr.mxu0 0.0
  %888 = vmatpush2.msra.mxu0 0.0
  %889 = vmatprep.subr.mxu0 0.0
  %890 = vmatpush2.msra.mxu0 0.0
  %891 = vmatprep.mubr.f32.mxu0 0.0
  %892 = vmatmul.mubr.f32.gmra.mxu0 %v825
  %v893 = vpop.f32.mrf.mxu0
  %v894 = vadd.f32 0.0, %v893
  %v895 = vpop.f32.mrf.mxu0
  %896 = vdwg.mxu0
  %v897 = vadd.f32 %v618, %v894
  %v898 = vtanh.pop %v897
  %900 = vrot.lane.b32.xlu0 %v821, 32
  %v901 = vpop.permute.xlu0 %900
  %v903 = vsel %vm664, %v898, %v901
  %v905 = vsel %vm747, %v903, 0
  %907 = vmatprep.subr.mxu0 0.0
  %908 = vmatpush1.msra.mxu0 0.0
  %909 = vmatprep.subr.mxu0 0.0
  %910 = vmatpush1.msra.mxu0 0.0
  %911 = vmatprep.subr.mxu0 0.0
  %912 = vmatpush1.msra.mxu0 0.0
  %913 = vmatprep.subr.mxu0 0.0
  %914 = vmatpush1.msra.mxu0 0.0
  %915 = vmatprep.subr.mxu0 0.0
  %916 = vmatpush1.msra.mxu0 0.0
  %917 = vmatprep.subr.mxu0 0.0
  %918 = vmatpush1.msra.mxu0 0.0
  %919 = vmatprep.subr.mxu0 0.0
  %920 = vmatpush1.msra.mxu0 0.0
  %921 = vmatprep.subr.mxu0 0.0
  %922 = vmatpush1.msra.mxu0 0.0
  %923 = vmatprep.subr.mxu0 0.0
  %924 = vmatpush1.msra.mxu0 %v662
  %925 = vmatprep.subr.mxu0 0.0
  %926 = vmatpush1.msra.mxu0 %v661
  %927 = vmatprep.subr.mxu0 0.0
  %928 = vmatpush1.msra.mxu0 %v660
  %929 = vmatprep.subr.mxu0 0.0
  %930 = vmatpush1.msra.mxu0 %v659
  %931 = vmatprep.subr.mxu0 0.0
  %932 = vmatpush1.msra.mxu0 %v658
  %933 = vmatprep.subr.mxu0 0.0
  %934 = vmatpush1.msra.mxu0 %v657
  %935 = vmatprep.subr.mxu0 0.0
  %936 = vmatpush1.msra.mxu0 %v656
  %937 = vmatprep.subr.mxu0 0.0
  %938 = vmatpush1.msra.mxu0 %v655
  %939 = vmatprep.subr.mxu0 0.0
  %940 = vmatpush2.msra.mxu0 0.0
  %941 = vmatprep.subr.mxu0 0.0
  %942 = vmatpush2.msra.mxu0 0.0
  %943 = vmatprep.subr.mxu0 0.0
  %944 = vmatpush2.msra.mxu0 0.0
  %945 = vmatprep.subr.mxu0 0.0
  %946 = vmatpush2.msra.mxu0 0.0
  %947 = vmatprep.subr.mxu0 0.0
  %948 = vmatpush2.msra.mxu0 0.0
  %949 = vmatprep.subr.mxu0 0.0
  %950 = vmatpush2.msra.mxu0 0.0
  %951 = vmatprep.subr.mxu0 0.0
  %952 = vmatpush2.msra.mxu0 0.0
  %953 = vmatprep.subr.mxu0 0.0
  %954 = vmatpush2.msra.mxu0 0.0
  %955 = vmatprep.subr.mxu0 0.0
  %956 = vmatpush2.msra.mxu0 0.0
  %957 = vmatprep.subr.mxu0 0.0
  %958 = vmatpush2.msra.mxu0 0.0
  %959 = vmatprep.subr.mxu0 0.0
  %960 = vmatpush2.msra.mxu0 0.0
  %961 = vmatprep.subr.mxu0 0.0
  %962 = vmatpush2.msra.mxu0 0.0
  %963 = vmatprep.subr.mxu0 0.0
  %964 = vmatpush2.msra.mxu0 0.0
  %965 = vmatprep.subr.mxu0 0.0
  %966 = vmatpush2.msra.mxu0 0.0
  %967 = vmatprep.subr.mxu0 0.0
  %968 = vmatpush2.msra.mxu0 0.0
  %969 = vmatprep.subr.mxu0 0.0
  %970 = vmatpush2.msra.mxu0 0.0
  %971 = vmatprep.mubr.f32.mxu0 0.0
  %972 = vmatmul.mubr.f32.gmra.mxu0 %v905
  %v973 = vpop.f32.mrf.mxu0
  %v974 = vadd.f32 %v745, %v973
  %v975 = vpop.f32.mrf.mxu0
  %976 = vdwg.mxu0
  %v977 = vtanh.pop %v974
  %978 = vst.msk [vmem:[#allocation2 + $0x8] sm:$0xff] %vm664, %v898
  %979 = vst.msk [vmem:[#allocation3 + $0x8] sm:$0xff] %vm664, %v977
  %v981 = vsel %vm664, %v898, 0
  %983 = vmatprep.subr.mxu0 0.0
  %984 = vmatpush1.msra.mxu0 0.0
  %985 = vmatprep.subr.mxu0 0.0
  %986 = vmatpush1.msra.mxu0 0.0
  %987 = vmatprep.subr.mxu0 0.0
  %988 = vmatpush1.msra.mxu0 0.0
  %989 = vmatprep.subr.mxu0 0.0
  %990 = vmatpush1.msra.mxu0 0.0
  %991 = vmatprep.subr.mxu0 0.0
  %992 = vmatpush1.msra.mxu0 0.0
  %993 = vmatprep.subr.mxu0 0.0
  %994 = vmatpush1.msra.mxu0 0.0
  %995 = vmatprep.subr.mxu0 0.0
  %996 = vmatpush1.msra.mxu0 0.0
  %997 = vmatprep.subr.mxu0 0.0
  %998 = vmatpush1.msra.mxu0 0.0
  %999 = vmatprep.subr.mxu0 0.0
  %1000 = vmatpush1.msra.mxu0 0.0
  %1001 = vmatprep.subr.mxu0 0.0
  %1002 = vmatpush1.msra.mxu0 0.0
  %1003 = vmatprep.subr.mxu0 0.0
  %1004 = vmatpush1.msra.mxu0 0.0
  %1005 = vmatprep.subr.mxu0 0.0
  %1006 = vmatpush1.msra.mxu0 0.0
  %1007 = vmatprep.subr.mxu0 0.0
  %1008 = vmatpush1.msra.mxu0 %v654
  %1009 = vmatprep.subr.mxu0 0.0
  %1010 = vmatpush1.msra.mxu0 %v653
  %1011 = vmatprep.subr.mxu0 0.0
  %1012 = vmatpush1.msra.mxu0 %v652
  %1013 = vmatprep.subr.mxu0 0.0
  %1014 = vmatpush1.msra.mxu0 %v651
  %1015 = vmatprep.subr.mxu0 0.0
  %1016 = vmatpush2.msra.mxu0 0.0
  %1017 = vmatprep.subr.mxu0 0.0
  %1018 = vmatpush2.msra.mxu0 0.0
  %1019 = vmatprep.subr.mxu0 0.0
  %1020 = vmatpush2.msra.mxu0 0.0
  %1021 = vmatprep.subr.mxu0 0.0
  %1022 = vmatpush2.msra.mxu0 0.0
  %1023 = vmatprep.subr.mxu0 0.0
  %1024 = vmatpush2.msra.mxu0 0.0
  %1025 = vmatprep.subr.mxu0 0.0
  %1026 = vmatpush2.msra.mxu0 0.0
  %1027 = vmatprep.subr.mxu0 0.0
  %1028 = vmatpush2.msra.mxu0 0.0
  %1029 = vmatprep.subr.mxu0 0.0
  %1030 = vmatpush2.msra.mxu0 0.0
  %1031 = vmatprep.subr.mxu0 0.0
  %1032 = vmatpush2.msra.mxu0 0.0
  %1033 = vmatprep.subr.mxu0 0.0
  %1034 = vmatpush2.msra.mxu0 0.0
  %1035 = vmatprep.subr.mxu0 0.0
  %1036 = vmatpush2.msra.mxu0 0.0
  %1037 = vmatprep.subr.mxu0 0.0
  %1038 = vmatpush2.msra.mxu0 0.0
  %1039 = vmatprep.subr.mxu0 0.0
  %1040 = vmatpush2.msra.mxu0 0.0
  %1041 = vmatprep.subr.mxu0 0.0
  %1042 = vmatpush2.msra.mxu0 0.0
  %1043 = vmatprep.subr.mxu0 0.0
  %1044 = vmatpush2.msra.mxu0 0.0
  %1045 = vmatprep.subr.mxu0 0.0
  %1046 = vmatpush2.msra.mxu0 0.0
  %1047 = vmatprep.mubr.f32.mxu0 0.0
  %1048 = vmatmul.mubr.f32.gmra.mxu0 %v981
  %v1049 = vpop.f32.mrf.mxu0
  %v1050 = vadd.f32 0.0, %v1049
  %v1051 = vpop.f32.mrf.mxu0
  %1052 = vdwg.mxu0
  %v1053 = vadd.f32 %v623, %v1050
  %v1054 = vtanh.pop %v1053
  %1056 = vrot.lane.b32.xlu0 %v977, 32
  %v1057 = vpop.permute.xlu0 %1056
  %v1059 = vsel %vm664, %v1054, %v1057
  %v1061 = vsel %vm747, %v1059, 0
  %1063 = vmatprep.subr.mxu0 0.0
  %1064 = vmatpush1.msra.mxu0 0.0
  %1065 = vmatprep.subr.mxu0 0.0
  %1066 = vmatpush1.msra.mxu0 0.0
  %1067 = vmatprep.subr.mxu0 0.0
  %1068 = vmatpush1.msra.mxu0 0.0
  %1069 = vmatprep.subr.mxu0 0.0
  %1070 = vmatpush1.msra.mxu0 0.0
  %1071 = vmatprep.subr.mxu0 0.0
  %1072 = vmatpush1.msra.mxu0 0.0
  %1073 = vmatprep.subr.mxu0 0.0
  %1074 = vmatpush1.msra.mxu0 0.0
  %1075 = vmatprep.subr.mxu0 0.0
  %1076 = vmatpush1.msra.mxu0 0.0
  %1077 = vmatprep.subr.mxu0 0.0
  %1078 = vmatpush1.msra.mxu0 0.0
  %1079 = vmatprep.subr.mxu0 0.0
  %1080 = vmatpush1.msra.mxu0 %v662
  %1081 = vmatprep.subr.mxu0 0.0
  %1082 = vmatpush1.msra.mxu0 %v661
  %1083 = vmatprep.subr.mxu0 0.0
  %1084 = vmatpush1.msra.mxu0 %v660
  %1085 = vmatprep.subr.mxu0 0.0
  %1086 = vmatpush1.msra.mxu0 %v659
  %1087 = vmatprep.subr.mxu0 0.0
  %1088 = vmatpush1.msra.mxu0 %v658
  %1089 = vmatprep.subr.mxu0 0.0
  %1090 = vmatpush1.msra.mxu0 %v657
  %1091 = vmatprep.subr.mxu0 0.0
  %1092 = vmatpush1.msra.mxu0 %v656
  %1093 = vmatprep.subr.mxu0 0.0
  %1094 = vmatpush1.msra.mxu0 %v655
  %1095 = vmatprep.subr.mxu0 0.0
  %1096 = vmatpush2.msra.mxu0 0.0
  %1097 = vmatprep.subr.mxu0 0.0
  %1098 = vmatpush2.msra.mxu0 0.0
  %1099 = vmatprep.subr.mxu0 0.0
  %1100 = vmatpush2.msra.mxu0 0.0
  %1101 = vmatprep.subr.mxu0 0.0
  %1102 = vmatpush2.msra.mxu0 0.0
  %1103 = vmatprep.subr.mxu0 0.0
  %1104 = vmatpush2.msra.mxu0 0.0
  %1105 = vmatprep.subr.mxu0 0.0
  %1106 = vmatpush2.msra.mxu0 0.0
  %1107 = vmatprep.subr.mxu0 0.0
  %1108 = vmatpush2.msra.mxu0 0.0
  %1109 = vmatprep.subr.mxu0 0.0
  %1110 = vmatpush2.msra.mxu0 0.0
  %1111 = vmatprep.subr.mxu0 0.0
  %1112 = vmatpush2.msra.mxu0 0.0
  %1113 = vmatprep.subr.mxu0 0.0
  %1114 = vmatpush2.msra.mxu0 0.0
  %1115 = vmatprep.subr.mxu0 0.0
  %1116 = vmatpush2.msra.mxu0 0.0
  %1117 = vmatprep.subr.mxu0 0.0
  %1118 = vmatpush2.msra.mxu0 0.0
  %1119 = vmatprep.subr.mxu0 0.0
  %1120 = vmatpush2.msra.mxu0 0.0
  %1121 = vmatprep.subr.mxu0 0.0
  %1122 = vmatpush2.msra.mxu0 0.0
  %1123 = vmatprep.subr.mxu0 0.0
  %1124 = vmatpush2.msra.mxu0 0.0
  %1125 = vmatprep.subr.mxu0 0.0
  %1126 = vmatpush2.msra.mxu0 0.0
  %1127 = vmatprep.mubr.f32.mxu0 0.0
  %1128 = vmatmul.mubr.f32.gmra.mxu0 %v1061
  %v1129 = vpop.f32.mrf.mxu0
  %v1130 = vadd.f32 %v745, %v1129
  %v1131 = vpop.f32.mrf.mxu0
  %1132 = vdwg.mxu0
  %v1133 = vtanh.pop %v1130
  %1134 = vst.msk [vmem:[#allocation2 + $0x10] sm:$0xff] %vm664, %v1054
  %1135 = vst.msk [vmem:[#allocation3 + $0x10] sm:$0xff] %vm664, %v1133
  %v1137 = vsel %vm664, %v1054, 0
  %1139 = vmatprep.subr.mxu0 0.0
  %1140 = vmatpush1.msra.mxu0 0.0
  %1141 = vmatprep.subr.mxu0 0.0
  %1142 = vmatpush1.msra.mxu0 0.0
  %1143 = vmatprep.subr.mxu0 0.0
  %1144 = vmatpush1.msra.mxu0 0.0
  %1145 = vmatprep.subr.mxu0 0.0
  %1146 = vmatpush1.msra.mxu0 0.0
  %1147 = vmatprep.subr.mxu0 0.0
  %1148 = vmatpush1.msra.mxu0 0.0
  %1149 = vmatprep.subr.mxu0 0.0
  %1150 = vmatpush1.msra.mxu0 0.0
  %1151 = vmatprep.subr.mxu0 0.0
  %1152 = vmatpush1.msra.mxu0 0.0
  %1153 = vmatprep.subr.mxu0 0.0
  %1154 = vmatpush1.msra.mxu0 0.0
  %1155 = vmatprep.subr.mxu0 0.0
  %1156 = vmatpush1.msra.mxu0 0.0
  %1157 = vmatprep.subr.mxu0 0.0
  %1158 = vmatpush1.msra.mxu0 0.0
  %1159 = vmatprep.subr.mxu0 0.0
  %1160 = vmatpush1.msra.mxu0 0.0
  %1161 = vmatprep.subr.mxu0 0.0
  %1162 = vmatpush1.msra.mxu0 0.0
  %1163 = vmatprep.subr.mxu0 0.0
  %1164 = vmatpush1.msra.mxu0 %v654
  %1165 = vmatprep.subr.mxu0 0.0
  %1166 = vmatpush1.msra.mxu0 %v653
  %1167 = vmatprep.subr.mxu0 0.0
  %1168 = vmatpush1.msra.mxu0 %v652
  %1169 = vmatprep.subr.mxu0 0.0
  %1170 = vmatpush1.msra.mxu0 %v651
  %1171 = vmatprep.subr.mxu0 0.0
  %1172 = vmatpush2.msra.mxu0 0.0
  %1173 = vmatprep.subr.mxu0 0.0
  %1174 = vmatpush2.msra.mxu0 0.0
  %1175 = vmatprep.subr.mxu0 0.0
  %1176 = vmatpush2.msra.mxu0 0.0
  %1177 = vmatprep.subr.mxu0 0.0
  %1178 = vmatpush2.msra.mxu0 0.0
  %1179 = vmatprep.subr.mxu0 0.0
  %1180 = vmatpush2.msra.mxu0 0.0
  %1181 = vmatprep.subr.mxu0 0.0
  %1182 = vmatpush2.msra.mxu0 0.0
  %1183 = vmatprep.subr.mxu0 0.0
  %1184 = vmatpush2.msra.mxu0 0.0
  %1185 = vmatprep.subr.mxu0 0.0
  %1186 = vmatpush2.msra.mxu0 0.0
  %1187 = vmatprep.subr.mxu0 0.0
  %1188 = vmatpush2.msra.mxu0 0.0
  %1189 = vmatprep.subr.mxu0 0.0
  %1190 = vmatpush2.msra.mxu0 0.0
  %1191 = vmatprep.subr.mxu0 0.0
  %1192 = vmatpush2.msra.mxu0 0.0
  %1193 = vmatprep.subr.mxu0 0.0
  %1194 = vmatpush2.msra.mxu0 0.0
  %1195 = vmatprep.subr.mxu0 0.0
  %1196 = vmatpush2.msra.mxu0 0.0
  %1197 = vmatprep.subr.mxu0 0.0
  %1198 = vmatpush2.msra.mxu0 0.0
  %1199 = vmatprep.subr.mxu0 0.0
  %1200 = vmatpush2.msra.mxu0 0.0
  %1201 = vmatprep.subr.mxu0 0.0
  %1202 = vmatpush2.msra.mxu0 0.0
  %1203 = vmatprep.mubr.f32.mxu0 0.0
  %1204 = vmatmul.mubr.f32.gmra.mxu0 %v1137
  %v1205 = vpop.f32.mrf.mxu0
  %v1206 = vadd.f32 0.0, %v1205
  %v1207 = vpop.f32.mrf.mxu0
  %1208 = vdwg.mxu0
  %v1209 = vadd.f32 %v628, %v1206
  %v1210 = vtanh.pop %v1209
  %1212 = vrot.lane.b32.xlu0 %v1133, 32
  %v1213 = vpop.permute.xlu0 %1212
  %v1215 = vsel %vm664, %v1210, %v1213
  %v1217 = vsel %vm747, %v1215, 0
  %1219 = vmatprep.subr.mxu0 0.0
  %1220 = vmatpush1.msra.mxu0 0.0
  %1221 = vmatprep.subr.mxu0 0.0
  %1222 = vmatpush1.msra.mxu0 0.0
  %1223 = vmatprep.subr.mxu0 0.0
  %1224 = vmatpush1.msra.mxu0 0.0
  %1225 = vmatprep.subr.mxu0 0.0
  %1226 = vmatpush1.msra.mxu0 0.0
  %1227 = vmatprep.subr.mxu0 0.0
  %1228 = vmatpush1.msra.mxu0 0.0
  %1229 = vmatprep.subr.mxu0 0.0
  %1230 = vmatpush1.msra.mxu0 0.0
  %1231 = vmatprep.subr.mxu0 0.0
  %1232 = vmatpush1.msra.mxu0 0.0
  %1233 = vmatprep.subr.mxu0 0.0
  %1234 = vmatpush1.msra.mxu0 0.0
  %1235 = vmatprep.subr.mxu0 0.0
  %1236 = vmatpush1.msra.mxu0 %v662
  %1237 = vmatprep.subr.mxu0 0.0
  %1238 = vmatpush1.msra.mxu0 %v661
  %1239 = vmatprep.subr.mxu0 0.0
  %1240 = vmatpush1.msra.mxu0 %v660
  %1241 = vmatprep.subr.mxu0 0.0
  %1242 = vmatpush1.msra.mxu0 %v659
  %1243 = vmatprep.subr.mxu0 0.0
  %1244 = vmatpush1.msra.mxu0 %v658
  %1245 = vmatprep.subr.mxu0 0.0
  %1246 = vmatpush1.msra.mxu0 %v657
  %1247 = vmatprep.subr.mxu0 0.0
  %1248 = vmatpush1.msra.mxu0 %v656
  %1249 = vmatprep.subr.mxu0 0.0
  %1250 = vmatpush1.msra.mxu0 %v655
  %1251 = vmatprep.subr.mxu0 0.0
  %1252 = vmatpush2.msra.mxu0 0.0
  %1253 = vmatprep.subr.mxu0 0.0
  %1254 = vmatpush2.msra.mxu0 0.0
  %1255 = vmatprep.subr.mxu0 0.0
  %1256 = vmatpush2.msra.mxu0 0.0
  %1257 = vmatprep.subr.mxu0 0.0
  %1258 = vmatpush2.msra.mxu0 0.0
  %1259 = vmatprep.subr.mxu0 0.0
  %1260 = vmatpush2.msra.mxu0 0.0
  %1261 = vmatprep.subr.mxu0 0.0
  %1262 = vmatpush2.msra.mxu0 0.0
  %1263 = vmatprep.subr.mxu0 0.0
  %1264 = vmatpush2.msra.mxu0 0.0
  %1265 = vmatprep.subr.mxu0 0.0
  %1266 = vmatpush2.msra.mxu0 0.0
  %1267 = vmatprep.subr.mxu0 0.0
  %1268 = vmatpush2.msra.mxu0 0.0
  %1269 = vmatprep.subr.mxu0 0.0
  %1270 = vmatpush2.msra.mxu0 0.0
  %1271 = vmatprep.subr.mxu0 0.0
  %1272 = vmatpush2.msra.mxu0 0.0
  %1273 = vmatprep.subr.mxu0 0.0
  %1274 = vmatpush2.msra.mxu0 0.0
  %1275 = vmatprep.subr.mxu0 0.0
  %1276 = vmatpush2.msra.mxu0 0.0
  %1277 = vmatprep.subr.mxu0 0.0
  %1278 = vmatpush2.msra.mxu0 0.0
  %1279 = vmatprep.subr.mxu0 0.0
  %1280 = vmatpush2.msra.mxu0 0.0
  %1281 = vmatprep.subr.mxu0 0.0
  %1282 = vmatpush2.msra.mxu0 0.0
  %1283 = vmatprep.mubr.f32.mxu0 0.0
  %1284 = vmatmul.mubr.f32.gmra.mxu0 %v1217
  %v1285 = vpop.f32.mrf.mxu0
  %v1286 = vadd.f32 %v745, %v1285
  %v1287 = vpop.f32.mrf.mxu0
  %1288 = vdwg.mxu0
  %v1289 = vtanh.pop %v1286
  %1290 = vst.msk [vmem:[#allocation2 + $0x18] sm:$0xff] %vm664, %v1210
  %1291 = vst.msk [vmem:[#allocation3 + $0x18] sm:$0xff] %vm664, %v1289
  %v1293 = vsel %vm664, %v1210, 0
  %1295 = vmatprep.subr.mxu0 0.0
  %1296 = vmatpush1.msra.mxu0 0.0
  %1297 = vmatprep.subr.mxu0 0.0
  %1298 = vmatpush1.msra.mxu0 0.0
  %1299 = vmatprep.subr.mxu0 0.0
  %1300 = vmatpush1.msra.mxu0 0.0
  %1301 = vmatprep.subr.mxu0 0.0
  %1302 = vmatpush1.msra.mxu0 0.0
  %1303 = vmatprep.subr.mxu0 0.0
  %1304 = vmatpush1.msra.mxu0 0.0
  %1305 = vmatprep.subr.mxu0 0.0
  %1306 = vmatpush1.msra.mxu0 0.0
  %1307 = vmatprep.subr.mxu0 0.0
  %1308 = vmatpush1.msra.mxu0 0.0
  %1309 = vmatprep.subr.mxu0 0.0
  %1310 = vmatpush1.msra.mxu0 0.0
  %1311 = vmatprep.subr.mxu0 0.0
  %1312 = vmatpush1.msra.mxu0 0.0
  %1313 = vmatprep.subr.mxu0 0.0
  %1314 = vmatpush1.msra.mxu0 0.0
  %1315 = vmatprep.subr.mxu0 0.0
  %1316 = vmatpush1.msra.mxu0 0.0
  %1317 = vmatprep.subr.mxu0 0.0
  %1318 = vmatpush1.msra.mxu0 0.0
  %1319 = vmatprep.subr.mxu0 0.0
  %1320 = vmatpush1.msra.mxu0 %v654
  %1321 = vmatprep.subr.mxu0 0.0
  %1322 = vmatpush1.msra.mxu0 %v653
  %1323 = vmatprep.subr.mxu0 0.0
  %1324 = vmatpush1.msra.mxu0 %v652
  %1325 = vmatprep.subr.mxu0 0.0
  %1326 = vmatpush1.msra.mxu0 %v651
  %1327 = vmatprep.subr.mxu0 0.0
  %1328 = vmatpush2.msra.mxu0 0.0
  %1329 = vmatprep.subr.mxu0 0.0
  %1330 = vmatpush2.msra.mxu0 0.0
  %1331 = vmatprep.subr.mxu0 0.0
  %1332 = vmatpush2.msra.mxu0 0.0
  %1333 = vmatprep.subr.mxu0 0.0
  %1334 = vmatpush2.msra.mxu0 0.0
  %1335 = vmatprep.subr.mxu0 0.0
  %1336 = vmatpush2.msra.mxu0 0.0
  %1337 = vmatprep.subr.mxu0 0.0
  %1338 = vmatpush2.msra.mxu0 0.0
  %1339 = vmatprep.subr.mxu0 0.0
  %1340 = vmatpush2.msra.mxu0 0.0
  %1341 = vmatprep.subr.mxu0 0.0
  %1342 = vmatpush2.msra.mxu0 0.0
  %1343 = vmatprep.subr.mxu0 0.0
  %1344 = vmatpush2.msra.mxu0 0.0
  %1345 = vmatprep.subr.mxu0 0.0
  %1346 = vmatpush2.msra.mxu0 0.0
  %1347 = vmatprep.subr.mxu0 0.0
  %1348 = vmatpush2.msra.mxu0 0.0
  %1349 = vmatprep.subr.mxu0 0.0
  %1350 = vmatpush2.msra.mxu0 0.0
  %1351 = vmatprep.subr.mxu0 0.0
  %1352 = vmatpush2.msra.mxu0 0.0
  %1353 = vmatprep.subr.mxu0 0.0
  %1354 = vmatpush2.msra.mxu0 0.0
  %1355 = vmatprep.subr.mxu0 0.0
  %1356 = vmatpush2.msra.mxu0 0.0
  %1357 = vmatprep.subr.mxu0 0.0
  %1358 = vmatpush2.msra.mxu0 0.0
  %1359 = vmatprep.mubr.f32.mxu0 0.0
  %1360 = vmatmul.mubr.f32.gmra.mxu0 %v1293
  %v1361 = vpop.f32.mrf.mxu0
  %v1362 = vadd.f32 0.0, %v1361
  %v1363 = vpop.f32.mrf.mxu0
  %1364 = vdwg.mxu0
  %v1365 = vadd.f32 %v633, %v1362
  %v1366 = vtanh.pop %v1365
  %1368 = vrot.lane.b32.xlu0 %v1289, 32
  %v1369 = vpop.permute.xlu0 %1368
  %v1371 = vsel %vm664, %v1366, %v1369
  %v1373 = vsel %vm747, %v1371, 0
  %1375 = vmatprep.subr.mxu0 0.0
  %1376 = vmatpush1.msra.mxu0 0.0
  %1377 = vmatprep.subr.mxu0 0.0
  %1378 = vmatpush1.msra.mxu0 0.0
  %1379 = vmatprep.subr.mxu0 0.0
  %1380 = vmatpush1.msra.mxu0 0.0
  %1381 = vmatprep.subr.mxu0 0.0
  %1382 = vmatpush1.msra.mxu0 0.0
  %1383 = vmatprep.subr.mxu0 0.0
  %1384 = vmatpush1.msra.mxu0 0.0
  %1385 = vmatprep.subr.mxu0 0.0
  %1386 = vmatpush1.msra.mxu0 0.0
  %1387 = vmatprep.subr.mxu0 0.0
  %1388 = vmatpush1.msra.mxu0 0.0
  %1389 = vmatprep.subr.mxu0 0.0
  %1390 = vmatpush1.msra.mxu0 0.0
  %1391 = vmatprep.subr.mxu0 0.0
  %1392 = vmatpush1.msra.mxu0 %v662
  %1393 = vmatprep.subr.mxu0 0.0
  %1394 = vmatpush1.msra.mxu0 %v661
  %1395 = vmatprep.subr.mxu0 0.0
  %1396 = vmatpush1.msra.mxu0 %v660
  %1397 = vmatprep.subr.mxu0 0.0
  %1398 = vmatpush1.msra.mxu0 %v659
  %1399 = vmatprep.subr.mxu0 0.0
  %1400 = vmatpush1.msra.mxu0 %v658
  %1401 = vmatprep.subr.mxu0 0.0
  %1402 = vmatpush1.msra.mxu0 %v657
  %1403 = vmatprep.subr.mxu0 0.0
  %1404 = vmatpush1.msra.mxu0 %v656
  %1405 = vmatprep.subr.mxu0 0.0
  %1406 = vmatpush1.msra.mxu0 %v655
  %1407 = vmatprep.subr.mxu0 0.0
  %1408 = vmatpush2.msra.mxu0 0.0
  %1409 = vmatprep.subr.mxu0 0.0
  %1410 = vmatpush2.msra.mxu0 0.0
  %1411 = vmatprep.subr.mxu0 0.0
  %1412 = vmatpush2.msra.mxu0 0.0
  %1413 = vmatprep.subr.mxu0 0.0
  %1414 = vmatpush2.msra.mxu0 0.0
  %1415 = vmatprep.subr.mxu0 0.0
  %1416 = vmatpush2.msra.mxu0 0.0
  %1417 = vmatprep.subr.mxu0 0.0
  %1418 = vmatpush2.msra.mxu0 0.0
  %1419 = vmatprep.subr.mxu0 0.0
  %1420 = vmatpush2.msra.mxu0 0.0
  %1421 = vmatprep.subr.mxu0 0.0
  %1422 = vmatpush2.msra.mxu0 0.0
  %1423 = vmatprep.subr.mxu0 0.0
  %1424 = vmatpush2.msra.mxu0 0.0
  %1425 = vmatprep.subr.mxu0 0.0
  %1426 = vmatpush2.msra.mxu0 0.0
  %1427 = vmatprep.subr.mxu0 0.0
  %1428 = vmatpush2.msra.mxu0 0.0
  %1429 = vmatprep.subr.mxu0 0.0
  %1430 = vmatpush2.msra.mxu0 0.0
  %1431 = vmatprep.subr.mxu0 0.0
  %1432 = vmatpush2.msra.mxu0 0.0
  %1433 = vmatprep.subr.mxu0 0.0
  %1434 = vmatpush2.msra.mxu0 0.0
  %1435 = vmatprep.subr.mxu0 0.0
  %1436 = vmatpush2.msra.mxu0 0.0
  %1437 = vmatprep.subr.mxu0 0.0
  %1438 = vmatpush2.msra.mxu0 0.0
  %1439 = vmatprep.mubr.f32.mxu0 0.0
  %1440 = vmatmul.mubr.f32.gmra.mxu0 %v1373
  %v1441 = vpop.f32.mrf.mxu0
  %v1442 = vadd.f32 %v745, %v1441
  %v1443 = vpop.f32.mrf.mxu0
  %1444 = vdwg.mxu0
  %v1445 = vtanh.pop %v1442
  %1446 = vst.msk [vmem:[#allocation2 + $0x20] sm:$0xff] %vm664, %v1366
  %1447 = vst.msk [vmem:[#allocation3 + $0x20] sm:$0xff] %vm664, %v1445
  %v1449 = vsel %vm664, %v1366, 0
  %1451 = vmatprep.subr.mxu0 0.0
  %1452 = vmatpush1.msra.mxu0 0.0
  %1453 = vmatprep.subr.mxu0 0.0
  %1454 = vmatpush1.msra.mxu0 0.0
  %1455 = vmatprep.subr.mxu0 0.0
  %1456 = vmatpush1.msra.mxu0 0.0
  %1457 = vmatprep.subr.mxu0 0.0
  %1458 = vmatpush1.msra.mxu0 0.0
  %1459 = vmatprep.subr.mxu0 0.0
  %1460 = vmatpush1.msra.mxu0 0.0
  %1461 = vmatprep.subr.mxu0 0.0
  %1462 = vmatpush1.msra.mxu0 0.0
  %1463 = vmatprep.subr.mxu0 0.0
  %1464 = vmatpush1.msra.mxu0 0.0
  %1465 = vmatprep.subr.mxu0 0.0
  %1466 = vmatpush1.msra.mxu0 0.0
  %1467 = vmatprep.subr.mxu0 0.0
  %1468 = vmatpush1.msra.mxu0 0.0
  %1469 = vmatprep.subr.mxu0 0.0
  %1470 = vmatpush1.msra.mxu0 0.0
  %1471 = vmatprep.subr.mxu0 0.0
  %1472 = vmatpush1.msra.mxu0 0.0
  %1473 = vmatprep.subr.mxu0 0.0
  %1474 = vmatpush1.msra.mxu0 0.0
  %1475 = vmatprep.subr.mxu0 0.0
  %1476 = vmatpush1.msra.mxu0 %v654
  %1477 = vmatprep.subr.mxu0 0.0
  %1478 = vmatpush1.msra.mxu0 %v653
  %1479 = vmatprep.subr.mxu0 0.0
  %1480 = vmatpush1.msra.mxu0 %v652
  %1481 = vmatprep.subr.mxu0 0.0
  %1482 = vmatpush1.msra.mxu0 %v651
  %1483 = vmatprep.subr.mxu0 0.0
  %1484 = vmatpush2.msra.mxu0 0.0
  %1485 = vmatprep.subr.mxu0 0.0
  %1486 = vmatpush2.msra.mxu0 0.0
  %1487 = vmatprep.subr.mxu0 0.0
  %1488 = vmatpush2.msra.mxu0 0.0
  %1489 = vmatprep.subr.mxu0 0.0
  %1490 = vmatpush2.msra.mxu0 0.0
  %1491 = vmatprep.subr.mxu0 0.0
  %1492 = vmatpush2.msra.mxu0 0.0
  %1493 = vmatprep.subr.mxu0 0.0
  %1494 = vmatpush2.msra.mxu0 0.0
  %1495 = vmatprep.subr.mxu0 0.0
  %1496 = vmatpush2.msra.mxu0 0.0
  %1497 = vmatprep.subr.mxu0 0.0
  %1498 = vmatpush2.msra.mxu0 0.0
  %1499 = vmatprep.subr.mxu0 0.0
  %1500 = vmatpush2.msra.mxu0 0.0
  %1501 = vmatprep.subr.mxu0 0.0
  %1502 = vmatpush2.msra.mxu0 0.0
  %1503 = vmatprep.subr.mxu0 0.0
  %1504 = vmatpush2.msra.mxu0 0.0
  %1505 = vmatprep.subr.mxu0 0.0
  %1506 = vmatpush2.msra.mxu0 0.0
  %1507 = vmatprep.subr.mxu0 0.0
  %1508 = vmatpush2.msra.mxu0 0.0
  %1509 = vmatprep.subr.mxu0 0.0
  %1510 = vmatpush2.msra.mxu0 0.0
  %1511 = vmatprep.subr.mxu0 0.0
  %1512 = vmatpush2.msra.mxu0 0.0
  %1513 = vmatprep.subr.mxu0 0.0
  %1514 = vmatpush2.msra.mxu0 0.0
  %1515 = vmatprep.mubr.f32.mxu0 0.0
  %1516 = vmatmul.mubr.f32.gmra.mxu0 %v1449
  %v1517 = vpop.f32.mrf.mxu0
  %v1518 = vadd.f32 0.0, %v1517
  %v1519 = vpop.f32.mrf.mxu0
  %1520 = vdwg.mxu0
  %v1521 = vadd.f32 %v638, %v1518
  %v1522 = vtanh.pop %v1521
  %1524 = vrot.lane.b32.xlu0 %v1445, 32
  %v1525 = vpop.permute.xlu0 %1524
  %v1527 = vsel %vm664, %v1522, %v1525
  %v1529 = vsel %vm747, %v1527, 0
  %1531 = vmatprep.subr.mxu0 0.0
  %1532 = vmatpush1.msra.mxu0 0.0
  %1533 = vmatprep.subr.mxu0 0.0
  %1534 = vmatpush1.msra.mxu0 0.0
  %1535 = vmatprep.subr.mxu0 0.0
  %1536 = vmatpush1.msra.mxu0 0.0
  %1537 = vmatprep.subr.mxu0 0.0
  %1538 = vmatpush1.msra.mxu0 0.0
  %1539 = vmatprep.subr.mxu0 0.0
  %1540 = vmatpush1.msra.mxu0 0.0
  %1541 = vmatprep.subr.mxu0 0.0
  %1542 = vmatpush1.msra.mxu0 0.0
  %1543 = vmatprep.subr.mxu0 0.0
  %1544 = vmatpush1.msra.mxu0 0.0
  %1545 = vmatprep.subr.mxu0 0.0
  %1546 = vmatpush1.msra.mxu0 0.0
  %1547 = vmatprep.subr.mxu0 0.0
  %1548 = vmatpush1.msra.mxu0 %v662
  %1549 = vmatprep.subr.mxu0 0.0
  %1550 = vmatpush1.msra.mxu0 %v661
  %1551 = vmatprep.subr.mxu0 0.0
  %1552 = vmatpush1.msra.mxu0 %v660
  %1553 = vmatprep.subr.mxu0 0.0
  %1554 = vmatpush1.msra.mxu0 %v659
  %1555 = vmatprep.subr.mxu0 0.0
  %1556 = vmatpush1.msra.mxu0 %v658
  %1557 = vmatprep.subr.mxu0 0.0
  %1558 = vmatpush1.msra.mxu0 %v657
  %1559 = vmatprep.subr.mxu0 0.0
  %1560 = vmatpush1.msra.mxu0 %v656
  %1561 = vmatprep.subr.mxu0 0.0
  %1562 = vmatpush1.msra.mxu0 %v655
  %1563 = vmatprep.subr.mxu0 0.0
  %1564 = vmatpush2.msra.mxu0 0.0
  %1565 = vmatprep.subr.mxu0 0.0
  %1566 = vmatpush2.msra.mxu0 0.0
  %1567 = vmatprep.subr.mxu0 0.0
  %1568 = vmatpush2.msra.mxu0 0.0
  %1569 = vmatprep.subr.mxu0 0.0
  %1570 = vmatpush2.msra.mxu0 0.0
  %1571 = vmatprep.subr.mxu0 0.0
  %1572 = vmatpush2.msra.mxu0 0.0
  %1573 = vmatprep.subr.mxu0 0.0
  %1574 = vmatpush2.msra.mxu0 0.0
  %1575 = vmatprep.subr.mxu0 0.0
  %1576 = vmatpush2.msra.mxu0 0.0
  %1577 = vmatprep.subr.mxu0 0.0
  %1578 = vmatpush2.msra.mxu0 0.0
  %1579 = vmatprep.subr.mxu0 0.0
  %1580 = vmatpush2.msra.mxu0 0.0
  %1581 = vmatprep.subr.mxu0 0.0
  %1582 = vmatpush2.msra.mxu0 0.0
  %1583 = vmatprep.subr.mxu0 0.0
  %1584 = vmatpush2.msra.mxu0 0.0
  %1585 = vmatprep.subr.mxu0 0.0
  %1586 = vmatpush2.msra.mxu0 0.0
  %1587 = vmatprep.subr.mxu0 0.0
  %1588 = vmatpush2.msra.mxu0 0.0
  %1589 = vmatprep.subr.mxu0 0.0
  %1590 = vmatpush2.msra.mxu0 0.0
  %1591 = vmatprep.subr.mxu0 0.0
  %1592 = vmatpush2.msra.mxu0 0.0
  %1593 = vmatprep.subr.mxu0 0.0
  %1594 = vmatpush2.msra.mxu0 0.0
  %1595 = vmatprep.mubr.f32.mxu0 0.0
  %1596 = vmatmul.mubr.f32.gmra.mxu0 %v1529
  %v1597 = vpop.f32.mrf.mxu0
  %v1598 = vadd.f32 %v745, %v1597
  %v1599 = vpop.f32.mrf.mxu0
  %1600 = vdwg.mxu0
  %v1601 = vtanh.pop %v1598
  %1602 = vst.msk [vmem:[#allocation2 + $0x28] sm:$0xff] %vm664, %v1522
  %1603 = vst.msk [vmem:[#allocation3 + $0x28] sm:$0xff] %vm664, %v1601
  %v1605 = vsel %vm664, %v1522, 0
  %1607 = vmatprep.subr.mxu0 0.0
  %1608 = vmatpush1.msra.mxu0 0.0
  %1609 = vmatprep.subr.mxu0 0.0
  %1610 = vmatpush1.msra.mxu0 0.0
  %1611 = vmatprep.subr.mxu0 0.0
  %1612 = vmatpush1.msra.mxu0 0.0
  %1613 = vmatprep.subr.mxu0 0.0
  %1614 = vmatpush1.msra.mxu0 0.0
  %1615 = vmatprep.subr.mxu0 0.0
  %1616 = vmatpush1.msra.mxu0 0.0
  %1617 = vmatprep.subr.mxu0 0.0
  %1618 = vmatpush1.msra.mxu0 0.0
  %1619 = vmatprep.subr.mxu0 0.0
  %1620 = vmatpush1.msra.mxu0 0.0
  %1621 = vmatprep.subr.mxu0 0.0
  %1622 = vmatpush1.msra.mxu0 0.0
  %1623 = vmatprep.subr.mxu0 0.0
  %1624 = vmatpush1.msra.mxu0 0.0
  %1625 = vmatprep.subr.mxu0 0.0
  %1626 = vmatpush1.msra.mxu0 0.0
  %1627 = vmatprep.subr.mxu0 0.0
  %1628 = vmatpush1.msra.mxu0 0.0
  %1629 = vmatprep.subr.mxu0 0.0
  %1630 = vmatpush1.msra.mxu0 0.0
  %1631 = vmatprep.subr.mxu0 0.0
  %1632 = vmatpush1.msra.mxu0 %v654
  %1633 = vmatprep.subr.mxu0 0.0
  %1634 = vmatpush1.msra.mxu0 %v653
  %1635 = vmatprep.subr.mxu0 0.0
  %1636 = vmatpush1.msra.mxu0 %v652
  %1637 = vmatprep.subr.mxu0 0.0
  %1638 = vmatpush1.msra.mxu0 %v651
  %1639 = vmatprep.subr.mxu0 0.0
  %1640 = vmatpush2.msra.mxu0 0.0
  %1641 = vmatprep.subr.mxu0 0.0
  %1642 = vmatpush2.msra.mxu0 0.0
  %1643 = vmatprep.subr.mxu0 0.0
  %1644 = vmatpush2.msra.mxu0 0.0
  %1645 = vmatprep.subr.mxu0 0.0
  %1646 = vmatpush2.msra.mxu0 0.0
  %1647 = vmatprep.subr.mxu0 0.0
  %1648 = vmatpush2.msra.mxu0 0.0
  %1649 = vmatprep.subr.mxu0 0.0
  %1650 = vmatpush2.msra.mxu0 0.0
  %1651 = vmatprep.subr.mxu0 0.0
  %1652 = vmatpush2.msra.mxu0 0.0
  %1653 = vmatprep.subr.mxu0 0.0
  %1654 = vmatpush2.msra.mxu0 0.0
  %1655 = vmatprep.subr.mxu0 0.0
  %1656 = vmatpush2.msra.mxu0 0.0
  %1657 = vmatprep.subr.mxu0 0.0
  %1658 = vmatpush2.msra.mxu0 0.0
  %1659 = vmatprep.subr.mxu0 0.0
  %1660 = vmatpush2.msra.mxu0 0.0
  %1661 = vmatprep.subr.mxu0 0.0
  %1662 = vmatpush2.msra.mxu0 0.0
  %1663 = vmatprep.subr.mxu0 0.0
  %1664 = vmatpush2.msra.mxu0 0.0
  %1665 = vmatprep.subr.mxu0 0.0
  %1666 = vmatpush2.msra.mxu0 0.0
  %1667 = vmatprep.subr.mxu0 0.0
  %1668 = vmatpush2.msra.mxu0 0.0
  %1669 = vmatprep.subr.mxu0 0.0
  %1670 = vmatpush2.msra.mxu0 0.0
  %1671 = vmatprep.mubr.f32.mxu0 0.0
  %1672 = vmatmul.mubr.f32.gmra.mxu0 %v1605
  %v1673 = vpop.f32.mrf.mxu0
  %v1674 = vadd.f32 0.0, %v1673
  %v1675 = vpop.f32.mrf.mxu0
  %1676 = vdwg.mxu0
  %v1677 = vadd.f32 %v643, %v1674
  %v1678 = vtanh.pop %v1677
  %1680 = vrot.lane.b32.xlu0 %v1601, 32
  %v1681 = vpop.permute.xlu0 %1680
  %v1683 = vsel %vm664, %v1678, %v1681
  %v1685 = vsel %vm747, %v1683, 0
  %1687 = vmatprep.subr.mxu0 0.0
  %1688 = vmatpush1.msra.mxu0 0.0
  %1689 = vmatprep.subr.mxu0 0.0
  %1690 = vmatpush1.msra.mxu0 0.0
  %1691 = vmatprep.subr.mxu0 0.0
  %1692 = vmatpush1.msra.mxu0 0.0
  %1693 = vmatprep.subr.mxu0 0.0
  %1694 = vmatpush1.msra.mxu0 0.0
  %1695 = vmatprep.subr.mxu0 0.0
  %1696 = vmatpush1.msra.mxu0 0.0
  %1697 = vmatprep.subr.mxu0 0.0
  %1698 = vmatpush1.msra.mxu0 0.0
  %1699 = vmatprep.subr.mxu0 0.0
  %1700 = vmatpush1.msra.mxu0 0.0
  %1701 = vmatprep.subr.mxu0 0.0
  %1702 = vmatpush1.msra.mxu0 0.0
  %1703 = vmatprep.subr.mxu0 0.0
  %1704 = vmatpush1.msra.mxu0 %v662
  %1705 = vmatprep.subr.mxu0 0.0
  %1706 = vmatpush1.msra.mxu0 %v661
  %1707 = vmatprep.subr.mxu0 0.0
  %1708 = vmatpush1.msra.mxu0 %v660
  %1709 = vmatprep.subr.mxu0 0.0
  %1710 = vmatpush1.msra.mxu0 %v659
  %1711 = vmatprep.subr.mxu0 0.0
  %1712 = vmatpush1.msra.mxu0 %v658
  %1713 = vmatprep.subr.mxu0 0.0
  %1714 = vmatpush1.msra.mxu0 %v657
  %1715 = vmatprep.subr.mxu0 0.0
  %1716 = vmatpush1.msra.mxu0 %v656
  %1717 = vmatprep.subr.mxu0 0.0
  %1718 = vmatpush1.msra.mxu0 %v655
  %1719 = vmatprep.subr.mxu0 0.0
  %1720 = vmatpush2.msra.mxu0 0.0
  %1721 = vmatprep.subr.mxu0 0.0
  %1722 = vmatpush2.msra.mxu0 0.0
  %1723 = vmatprep.subr.mxu0 0.0
  %1724 = vmatpush2.msra.mxu0 0.0
  %1725 = vmatprep.subr.mxu0 0.0
  %1726 = vmatpush2.msra.mxu0 0.0
  %1727 = vmatprep.subr.mxu0 0.0
  %1728 = vmatpush2.msra.mxu0 0.0
  %1729 = vmatprep.subr.mxu0 0.0
  %1730 = vmatpush2.msra.mxu0 0.0
  %1731 = vmatprep.subr.mxu0 0.0
  %1732 = vmatpush2.msra.mxu0 0.0
  %1733 = vmatprep.subr.mxu0 0.0
  %1734 = vmatpush2.msra.mxu0 0.0
  %1735 = vmatprep.subr.mxu0 0.0
  %1736 = vmatpush2.msra.mxu0 0.0
  %1737 = vmatprep.subr.mxu0 0.0
  %1738 = vmatpush2.msra.mxu0 0.0
  %1739 = vmatprep.subr.mxu0 0.0
  %1740 = vmatpush2.msra.mxu0 0.0
  %1741 = vmatprep.subr.mxu0 0.0
  %1742 = vmatpush2.msra.mxu0 0.0
  %1743 = vmatprep.subr.mxu0 0.0
  %1744 = vmatpush2.msra.mxu0 0.0
  %1745 = vmatprep.subr.mxu0 0.0
  %1746 = vmatpush2.msra.mxu0 0.0
  %1747 = vmatprep.subr.mxu0 0.0
  %1748 = vmatpush2.msra.mxu0 0.0
  %1749 = vmatprep.subr.mxu0 0.0
  %1750 = vmatpush2.msra.mxu0 0.0
  %1751 = vmatprep.mubr.f32.mxu0 0.0
  %1752 = vmatmul.mubr.f32.gmra.mxu0 %v1685
  %v1753 = vpop.f32.mrf.mxu0
  %v1754 = vadd.f32 %v745, %v1753
  %v1755 = vpop.f32.mrf.mxu0
  %1756 = vdwg.mxu0
  %v1757 = vtanh.pop %v1754
  %1758 = vst.msk [vmem:[#allocation2 + $0x30] sm:$0xff] %vm664, %v1678
  %1759 = vst.msk [vmem:[#allocation3 + $0x30] sm:$0xff] %vm664, %v1757
  %v1761 = vsel %vm664, %v1678, 0
  %1763 = vmatprep.subr.mxu0 0.0
  %1764 = vmatpush1.msra.mxu0 0.0
  %1765 = vmatprep.subr.mxu0 0.0
  %1766 = vmatpush1.msra.mxu0 0.0
  %1767 = vmatprep.subr.mxu0 0.0
  %1768 = vmatpush1.msra.mxu0 0.0
  %1769 = vmatprep.subr.mxu0 0.0
  %1770 = vmatpush1.msra.mxu0 0.0
  %1771 = vmatprep.subr.mxu0 0.0
  %1772 = vmatpush1.msra.mxu0 0.0
  %1773 = vmatprep.subr.mxu0 0.0
  %1774 = vmatpush1.msra.mxu0 0.0
  %1775 = vmatprep.subr.mxu0 0.0
  %1776 = vmatpush1.msra.mxu0 0.0
  %1777 = vmatprep.subr.mxu0 0.0
  %1778 = vmatpush1.msra.mxu0 0.0
  %1779 = vmatprep.subr.mxu0 0.0
  %1780 = vmatpush1.msra.mxu0 0.0
  %1781 = vmatprep.subr.mxu0 0.0
  %1782 = vmatpush1.msra.mxu0 0.0
  %1783 = vmatprep.subr.mxu0 0.0
  %1784 = vmatpush1.msra.mxu0 0.0
  %1785 = vmatprep.subr.mxu0 0.0
  %1786 = vmatpush1.msra.mxu0 0.0
  %1787 = vmatprep.subr.mxu0 0.0
  %1788 = vmatpush1.msra.mxu0 %v654
  %1789 = vmatprep.subr.mxu0 0.0
  %1790 = vmatpush1.msra.mxu0 %v653
  %1791 = vmatprep.subr.mxu0 0.0
  %1792 = vmatpush1.msra.mxu0 %v652
  %1793 = vmatprep.subr.mxu0 0.0
  %1794 = vmatpush1.msra.mxu0 %v651
  %1795 = vmatprep.subr.mxu0 0.0
  %1796 = vmatpush2.msra.mxu0 0.0
  %1797 = vmatprep.subr.mxu0 0.0
  %1798 = vmatpush2.msra.mxu0 0.0
  %1799 = vmatprep.subr.mxu0 0.0
  %1800 = vmatpush2.msra.mxu0 0.0
  %1801 = vmatprep.subr.mxu0 0.0
  %1802 = vmatpush2.msra.mxu0 0.0
  %1803 = vmatprep.subr.mxu0 0.0
  %1804 = vmatpush2.msra.mxu0 0.0
  %1805 = vmatprep.subr.mxu0 0.0
  %1806 = vmatpush2.msra.mxu0 0.0
  %1807 = vmatprep.subr.mxu0 0.0
  %1808 = vmatpush2.msra.mxu0 0.0
  %1809 = vmatprep.subr.mxu0 0.0
  %1810 = vmatpush2.msra.mxu0 0.0
  %1811 = vmatprep.subr.mxu0 0.0
  %1812 = vmatpush2.msra.mxu0 0.0
  %1813 = vmatprep.subr.mxu0 0.0
  %1814 = vmatpush2.msra.mxu0 0.0
  %1815 = vmatprep.subr.mxu0 0.0
  %1816 = vmatpush2.msra.mxu0 0.0
  %1817 = vmatprep.subr.mxu0 0.0
  %1818 = vmatpush2.msra.mxu0 0.0
  %1819 = vmatprep.subr.mxu0 0.0
  %1820 = vmatpush2.msra.mxu0 0.0
  %1821 = vmatprep.subr.mxu0 0.0
  %1822 = vmatpush2.msra.mxu0 0.0
  %1823 = vmatprep.subr.mxu0 0.0
  %1824 = vmatpush2.msra.mxu0 0.0
  %1825 = vmatprep.subr.mxu0 0.0
  %1826 = vmatpush2.msra.mxu0 0.0
  %1827 = vmatprep.mubr.f32.mxu0 0.0
  %1828 = vmatmul.mubr.f32.gmra.mxu0 %v1761
  %v1829 = vpop.f32.mrf.mxu0
  %v1830 = vadd.f32 0.0, %v1829
  %v1831 = vpop.f32.mrf.mxu0
  %1832 = vdwg.mxu0
  %v1833 = vadd.f32 %v648, %v1830
  %v1834 = vtanh.pop %v1833
  %1836 = vrot.lane.b32.xlu0 %v1757, 32
  %v1837 = vpop.permute.xlu0 %1836
  %v1839 = vsel %vm664, %v1834, %v1837
  %v1841 = vsel %vm747, %v1839, 0
  %1843 = vmatprep.subr.mxu0 0.0
  %1844 = vmatpush1.msra.mxu0 0.0
  %1845 = vmatprep.subr.mxu0 0.0
  %1846 = vmatpush1.msra.mxu0 0.0
  %1847 = vmatprep.subr.mxu0 0.0
  %1848 = vmatpush1.msra.mxu0 0.0
  %1849 = vmatprep.subr.mxu0 0.0
  %1850 = vmatpush1.msra.mxu0 0.0
  %1851 = vmatprep.subr.mxu0 0.0
  %1852 = vmatpush1.msra.mxu0 0.0
  %1853 = vmatprep.subr.mxu0 0.0
  %1854 = vmatpush1.msra.mxu0 0.0
  %1855 = vmatprep.subr.mxu0 0.0
  %1856 = vmatpush1.msra.mxu0 0.0
  %1857 = vmatprep.subr.mxu0 0.0
  %1858 = vmatpush1.msra.mxu0 0.0
  %1859 = vmatprep.subr.mxu0 0.0
  %1860 = vmatpush1.msra.mxu0 %v662
  %1861 = vmatprep.subr.mxu0 0.0
  %1862 = vmatpush1.msra.mxu0 %v661
  %1863 = vmatprep.subr.mxu0 0.0
  %1864 = vmatpush1.msra.mxu0 %v660
  %1865 = vmatprep.subr.mxu0 0.0
  %1866 = vmatpush1.msra.mxu0 %v659
  %1867 = vmatprep.subr.mxu0 0.0
  %1868 = vmatpush1.msra.mxu0 %v658
  %1869 = vmatprep.subr.mxu0 0.0
  %1870 = vmatpush1.msra.mxu0 %v657
  %1871 = vmatprep.subr.mxu0 0.0
  %1872 = vmatpush1.msra.mxu0 %v656
  %1873 = vmatprep.subr.mxu0 0.0
  %1874 = vmatpush1.msra.mxu0 %v655
  %1875 = vmatprep.subr.mxu0 0.0
  %1876 = vmatpush2.msra.mxu0 0.0
  %1877 = vmatprep.subr.mxu0 0.0
  %1878 = vmatpush2.msra.mxu0 0.0
  %1879 = vmatprep.subr.mxu0 0.0
  %1880 = vmatpush2.msra.mxu0 0.0
  %1881 = vmatprep.subr.mxu0 0.0
  %1882 = vmatpush2.msra.mxu0 0.0
  %1883 = vmatprep.subr.mxu0 0.0
  %1884 = vmatpush2.msra.mxu0 0.0
  %1885 = vmatprep.subr.mxu0 0.0
  %1886 = vmatpush2.msra.mxu0 0.0
  %1887 = vmatprep.subr.mxu0 0.0
  %1888 = vmatpush2.msra.mxu0 0.0
  %1889 = vmatprep.subr.mxu0 0.0
  %1890 = vmatpush2.msra.mxu0 0.0
  %1891 = vmatprep.subr.mxu0 0.0
  %1892 = vmatpush2.msra.mxu0 0.0
  %1893 = vmatprep.subr.mxu0 0.0
  %1894 = vmatpush2.msra.mxu0 0.0
  %1895 = vmatprep.subr.mxu0 0.0
  %1896 = vmatpush2.msra.mxu0 0.0
  %1897 = vmatprep.subr.mxu0 0.0
  %1898 = vmatpush2.msra.mxu0 0.0
  %1899 = vmatprep.subr.mxu0 0.0
  %1900 = vmatpush2.msra.mxu0 0.0
  %1901 = vmatprep.subr.mxu0 0.0
  %1902 = vmatpush2.msra.mxu0 0.0
  %1903 = vmatprep.subr.mxu0 0.0
  %1904 = vmatpush2.msra.mxu0 0.0
  %1905 = vmatprep.subr.mxu0 0.0
  %1906 = vmatpush2.msra.mxu0 0.0
  %1907 = vmatprep.mubr.f32.mxu0 0.0
  %1908 = vmatmul.mubr.f32.gmra.mxu0 %v1841
  %v1909 = vpop.f32.mrf.mxu0
  %v1910 = vadd.f32 %v745, %v1909
  %v1911 = vpop.f32.mrf.mxu0
  %1912 = vdwg.mxu0
  %v1913 = vtanh.pop %v1910
  %1914 = vst.msk [vmem:[#allocation2 + $0x38] sm:$0xff] %vm664, %v1834
  %1915 = vst.msk [vmem:[#allocation3 + $0x38] sm:$0xff] %vm664, %v1913
  %v1916 = vld [vmem:[#allocation2] sm:$0xff]
  %v1917 = vld [vmem:[#allocation2 + $0x8] sm:$0xff]
  %v1918 = vld [vmem:[#allocation2 + $0x10] sm:$0xff]
  %v1919 = vld [vmem:[#allocation2 + $0x18] sm:$0xff]
  %v1920 = vld [vmem:[#allocation2 + $0x20] sm:$0xff]
  %v1921 = vld [vmem:[#allocation2 + $0x28] sm:$0xff]
  %v1922 = vld [vmem:[#allocation2 + $0x30] sm:$0xff]
  %v1923 = vld [vmem:[#allocation2 + $0x38] sm:$0xff]
  %v1924 = vld [vmem:[#allocation3] sm:$0xff]
  %v1925 = vld [vmem:[#allocation3 + $0x8] sm:$0xff]
  %v1926 = vld [vmem:[#allocation3 + $0x10] sm:$0xff]
  %v1927 = vld [vmem:[#allocation3 + $0x18] sm:$0xff]
  %v1928 = vld [vmem:[#allocation3 + $0x20] sm:$0xff]
  %v1929 = vld [vmem:[#allocation3 + $0x28] sm:$0xff]
  %v1930 = vld [vmem:[#allocation3 + $0x30] sm:$0xff]
  %v1931 = vld [vmem:[#allocation3 + $0x38] sm:$0xff]
  %1940 = vrot.lane.b32.xlu0 %v1924, 32
  %v1941 = vpop.permute.xlu0 %1940
  %1942 = vrot.lane.b32.xlu0 %v1925, 32
  %v1943 = vpop.permute.xlu0 %1942
  %1944 = vrot.lane.b32.xlu0 %v1926, 32
  %v1945 = vpop.permute.xlu0 %1944
  %1946 = vrot.lane.b32.xlu0 %v1927, 32
  %v1947 = vpop.permute.xlu0 %1946
  %1948 = vrot.lane.b32.xlu0 %v1928, 32
  %v1949 = vpop.permute.xlu0 %1948
  %1950 = vrot.lane.b32.xlu0 %v1929, 32
  %v1951 = vpop.permute.xlu0 %1950
  %1952 = vrot.lane.b32.xlu0 %v1930, 32
  %v1953 = vpop.permute.xlu0 %1952
  %1954 = vrot.lane.b32.xlu0 %v1931, 32
  %v1955 = vpop.permute.xlu0 %1954
  %v1964 = vsel %vm664, %v1916, %v1941
  %v1965 = vsel %vm664, %v1917, %v1943
  %v1966 = vsel %vm664, %v1918, %v1945
  %v1967 = vsel %vm664, %v1919, %v1947
  %v1968 = vsel %vm664, %v1920, %v1949
  %v1969 = vsel %vm664, %v1921, %v1951
  %v1970 = vsel %vm664, %v1922, %v1953
  %v1971 = vsel %vm664, %v1923, %v1955
  %v1972 = vld [vmem:[%s6] sm:$0xff]
  %v1973 = vld [vmem:[%s6 + $0x8] sm:$0xff]
  %v1974 = vld [vmem:[%s6 + $0x10] sm:$0xff]
  %v1975 = vld [vmem:[%s6 + $0x18] sm:$0xff]
  %v1976 = vld [vmem:[%s6 + $0x20] sm:$0xff]
  %v1977 = vld [vmem:[%s6 + $0x28] sm:$0xff]
  %v1978 = vld [vmem:[%s6 + $0x30] sm:$0xff]
  %v1979 = vld [vmem:[%s6 + $0x38] sm:$0xff]
  %v1980 = vld [vmem:[%s7] sm:$0x1]
  %v1982 = vlaneseq
  %v1983 = vshrl.u32 %v1982, 7
  %v1984 = vsub.s32 0, %v1983
  %v1985 = vrot.slane %v1980, %v1984
  %v1988 = vsel %vm747, %v1964, 0
  %v1991 = vsel %vm747, %v1965, 0
  %v1994 = vsel %vm747, %v1966, 0
  %v1997 = vsel %vm747, %v1967, 0
  %v2000 = vsel %vm747, %v1968, 0
  %v2003 = vsel %vm747, %v1969, 0
  %v2006 = vsel %vm747, %v1970, 0
  %v2009 = vsel %vm747, %v1971, 0
  %2011 = vmatprep.subr.mxu0 0.0
  %2012 = vmatpush1.msra.mxu0 0.0
  %2013 = vmatprep.subr.mxu0 0.0
  %2014 = vmatpush1.msra.mxu0 0.0
  %2015 = vmatprep.subr.mxu0 0.0
  %2016 = vmatpush1.msra.mxu0 0.0
  %2017 = vmatprep.subr.mxu0 0.0
  %2018 = vmatpush1.msra.mxu0 0.0
  %2019 = vmatprep.subr.mxu0 0.0
  %2020 = vmatpush1.msra.mxu0 0.0
  %2021 = vmatprep.subr.mxu0 0.0
  %2022 = vmatpush1.msra.mxu0 0.0
  %2023 = vmatprep.subr.mxu0 0.0
  %2024 = vmatpush1.msra.mxu0 0.0
  %2025 = vmatprep.subr.mxu0 0.0
  %2026 = vmatpush1.msra.mxu0 0.0
  %2027 = vmatprep.subr.mxu0 0.0
  %2028 = vmatpush1.msra.mxu0 %v1979
  %2029 = vmatprep.subr.mxu0 0.0
  %2030 = vmatpush1.msra.mxu0 %v1978
  %2031 = vmatprep.subr.mxu0 0.0
  %2032 = vmatpush1.msra.mxu0 %v1977
  %2033 = vmatprep.subr.mxu0 0.0
  %2034 = vmatpush1.msra.mxu0 %v1976
  %2035 = vmatprep.subr.mxu0 0.0
  %2036 = vmatpush1.msra.mxu0 %v1975
  %2037 = vmatprep.subr.mxu0 0.0
  %2038 = vmatpush1.msra.mxu0 %v1974
  %2039 = vmatprep.subr.mxu0 0.0
  %2040 = vmatpush1.msra.mxu0 %v1973
  %2041 = vmatprep.subr.mxu0 0.0
  %2042 = vmatpush1.msra.mxu0 %v1972
  %2043 = vmatprep.subr.mxu0 0.0
  %2044 = vmatpush2.msra.mxu0 0.0
  %2045 = vmatprep.subr.mxu0 0.0
  %2046 = vmatpush2.msra.mxu0 0.0
  %2047 = vmatprep.subr.mxu0 0.0
  %2048 = vmatpush2.msra.mxu0 0.0
  %2049 = vmatprep.subr.mxu0 0.0
  %2050 = vmatpush2.msra.mxu0 0.0
  %2051 = vmatprep.subr.mxu0 0.0
  %2052 = vmatpush2.msra.mxu0 0.0
  %2053 = vmatprep.subr.mxu0 0.0
  %2054 = vmatpush2.msra.mxu0 0.0
  %2055 = vmatprep.subr.mxu0 0.0
  %2056 = vmatpush2.msra.mxu0 0.0
  %2057 = vmatprep.subr.mxu0 0.0
  %2058 = vmatpush2.msra.mxu0 0.0
  %2059 = vmatprep.subr.mxu0 0.0
  %2060 = vmatpush2.msra.mxu0 0.0
  %2061 = vmatprep.subr.mxu0 0.0
  %2062 = vmatpush2.msra.mxu0 0.0
  %2063 = vmatprep.subr.mxu0 0.0
  %2064 = vmatpush2.msra.mxu0 0.0
  %2065 = vmatprep.subr.mxu0 0.0
  %2066 = vmatpush2.msra.mxu0 0.0
  %2067 = vmatprep.subr.mxu0 0.0
  %2068 = vmatpush2.msra.mxu0 0.0
  %2069 = vmatprep.subr.mxu0 0.0
  %2070 = vmatpush2.msra.mxu0 0.0
  %2071 = vmatprep.subr.mxu0 0.0
  %2072 = vmatpush2.msra.mxu0 0.0
  %2073 = vmatprep.subr.mxu0 0.0
  %2074 = vmatpush2.msra.mxu0 0.0
  %2075 = vmatprep.mubr.f32.mxu0 0.0
  %2076 = vmatmul.mubr.f32.gmra.mxu0 %v1988
  %v2077 = vpop.f32.mrf.mxu0
  %v2078 = vadd.f32 %v1985, %v2077
  %v2079 = vpop.f32.mrf.mxu0
  %2080 = vmatprep.mubr.f32.mxu0 0.0
  %2081 = vmatmul.mubr.f32.gmra.mxu0 %v1991
  %v2082 = vpop.f32.mrf.mxu0
  %v2083 = vadd.f32 %v1985, %v2082
  %v2084 = vpop.f32.mrf.mxu0
  %2085 = vmatprep.mubr.f32.mxu0 0.0
  %2086 = vmatmul.mubr.f32.gmra.mxu0 %v1994
  %v2087 = vpop.f32.mrf.mxu0
  %v2088 = vadd.f32 %v1985, %v2087
  %v2089 = vpop.f32.mrf.mxu0
  %2090 = vmatprep.mubr.f32.mxu0 0.0
  %2091 = vmatmul.mubr.f32.gmra.mxu0 %v1997
  %v2092 = vpop.f32.mrf.mxu0
  %v2093 = vadd.f32 %v1985, %v2092
  %v2094 = vpop.f32.mrf.mxu0
  %2095 = vmatprep.mubr.f32.mxu0 0.0
  %2096 = vmatmul.mubr.f32.gmra.mxu0 %v2000
  %v2097 = vpop.f32.mrf.mxu0
  %v2098 = vadd.f32 %v1985, %v2097
  %v2099 = vpop.f32.mrf.mxu0
  %2100 = vmatprep.mubr.f32.mxu0 0.0
  %2101 = vmatmul.mubr.f32.gmra.mxu0 %v2003
  %v2102 = vpop.f32.mrf.mxu0
  %v2103 = vadd.f32 %v1985, %v2102
  %v2104 = vpop.f32.mrf.mxu0
  %2105 = vmatprep.mubr.f32.mxu0 0.0
  %2106 = vmatmul.mubr.f32.gmra.mxu0 %v2006
  %v2107 = vpop.f32.mrf.mxu0
  %v2108 = vadd.f32 %v1985, %v2107
  %v2109 = vpop.f32.mrf.mxu0
  %2110 = vmatprep.mubr.f32.mxu0 0.0
  %2111 = vmatmul.mubr.f32.gmra.mxu0 %v2009
  %v2112 = vpop.f32.mrf.mxu0
  %v2113 = vadd.f32 %v1985, %v2112
  %v2114 = vpop.f32.mrf.mxu0
  %2115 = vdwg.mxu0
  %2116 = vst [vmem:[%s8] sm:$0xff] %v2078
  %2117 = vst [vmem:[%s8 + $0x8] sm:$0xff] %v2083
  %2118 = vst [vmem:[%s8 + $0x10] sm:$0xff] %v2088
  %2119 = vst [vmem:[%s8 + $0x18] sm:$0xff] %v2093
  %2120 = vst [vmem:[%s8 + $0x20] sm:$0xff] %v2098
  %2121 = vst [vmem:[%s8 + $0x28] sm:$0xff] %v2103
  %2122 = vst [vmem:[%s8 + $0x30] sm:$0xff] %v2108
  %2123 = vst [vmem:[%s8 + $0x38] sm:$0xff] %v2113
  %2124 = vst.msk [vmem:[%s9] sm:$0xff] %vm664, %v1834
  %2125 = vst.msk [vmem:[%s10] sm:$0xff] %vm664, %v1913
  // Predicated region
  $region34: #{model_forward.1} parent=0 // pred_check
    _
  $region35: #{model_forward.1} parent=0 // pred_check_branch
    %2127 = sbr.rel (0) target = $region37
  $region36: #{model_forward.1} parent=0 // pred_region
    _
  $region37: #{model_forward.1} parent=0 // pred_fallthru
    _
  // Predicated region
  $region38: #{model_forward.1} parent=0 // pred_check
    _
  $region39: #{model_forward.1} parent=0 // pred_check_branch
    %2129 = sbr.rel (0) target = $region41
  $region40: #{model_forward.1} parent=0 // pred_region
    _
  $region41: #{model_forward.1} parent=0 // pred_fallthru
    _
  // Predicated region
  $region42: #{model_forward.1} parent=0 // pred_check
    _
  $region43: #{model_forward.1} parent=0 // pred_check_branch
    %2131 = sbr.rel (0) target = $region45
  $region44: #{model_forward.1} parent=0 // pred_region
    _
  $region45: #{model_forward.1} parent=0 // pred_fallthru
    _
  // Predicated region
  $region46: #{model_forward.1} parent=0 // pred_check
    _
  $region47: #{model_forward.1} parent=0 // pred_check_branch
    %2133 = sbr.rel (0) target = $region49
  $region48: #{model_forward.1} parent=0 // pred_region
    _
  $region49: #{model_forward.1} parent=0 // pred_fallthru
    _
  // Predicated region
  $region50: #{model_forward.1} parent=0 // pred_check
    _
  $region51: #{model_forward.1} parent=0 // pred_check_branch
    %2135 = sbr.rel (0) target = $region53
  $region52: #{model_forward.1} parent=0 // pred_region
    _
  $region53: #{model_forward.1} parent=0 // pred_fallthru
    _
  // Predicated region
  $region54: #{model_forward.1} parent=0 // pred_check
    _
  $region55: #{model_forward.1} parent=0 // pred_check_branch
    %2137 = sbr.rel (0) target = $region57
  $region56: #{model_forward.1} parent=0 // pred_region
    _
  $region57: #{model_forward.1} parent=0 // pred_fallthru
    _

</llo_original>
